<compile_context>
chip_gen: v7x
topology: tpu7x:2x2x1
jax: 0.10.0
libtpu: 0.0.40
codegen_flags: <defaults>
</compile_context>

<pallas_src>
import functools

import jax
import jax.numpy as jnp
from jax.experimental import pallas as pl
from jax.experimental.pallas import tpu as pltpu


# ----------------------------------------------------------------------------
# Host-side weight folding (run ONCE per parameter set, see fold_params)
# ----------------------------------------------------------------------------
def _band_weights(w, W, dtype=jnp.bfloat16):
    """3x3 HWIO conv weight -> fused-K banded matrix of shape (3*W*Cin, W*Cout).

    Band ky satisfies  band[ky][xin*Cin+ci, x*Cout+co] = w[ky, kx, ci, co]
    with xin = x + kx - 1; out-of-range taps are dropped, which realizes SAME
    zero-padding along width.  The conv becomes
        out = concat([row_shift(-1), rows, row_shift(+1)], lanes) @ band_stack
    """
    bands = []
    for ky in range(3):
        acc = None
        for kx in range(3):
            # S[xin, x] = 1 iff xin == x + kx - 1  (jnp.eye: 1 iff j - i == k)
            shift = jnp.eye(W, W, k=1 - kx, dtype=w.dtype)
            term = jnp.kron(shift, w[ky, kx])
            acc = term if acc is None else acc + term
        bands.append(acc)
    return jnp.concatenate(bands, axis=0).astype(dtype)   # (3*W*Cin, W*Cout)


def _tile_bias(b, W):
    """(Cout,) -> (1, W*Cout) lane-dense bias row matching the slab layout."""
    return jnp.tile(b, W)[None, :].astype(jnp.float32)


def fold_params(params, W):
    """Fold all conv weights once; call this outside the training/inference loop."""
    w1 = jnp.stack([_band_weights(blk[0], W) for blk in params["blocks"]])
    b1 = jnp.stack([_tile_bias(blk[1], W) for blk in params["blocks"]])
    w2 = jnp.stack([_band_weights(blk[2], W) for blk in params["blocks"]])
    b2 = jnp.stack([_tile_bias(blk[3], W) for blk in params["blocks"]])
    wt = _band_weights(params["tail_w"], W)                # (3*WC, WC) bf16
    bt = _tile_bias(params["tail_b"], W)                   # (1, WC)   f32
    return dict(w1=w1, b1=b1, w2=w2, b2=b2, wt=wt, bt=bt)


# ----------------------------------------------------------------------------
# Kernel
# ----------------------------------------------------------------------------
def reslist_kernel(x_ref, w1_ref, b1_ref, w2_ref, b2_ref, wt_ref, bt_ref,
                   o_ref, *, num_blocks, res_scale, slope):
    BB, H, WC = x_ref.shape
    M = BB * H

    # Masks that zero the rows which would (after a +-1 row shift of the
    # stacked (BB*H) slab) pull data across an image boundary.  Hoisted out of
    # conv3 so the iota/compare runs once per kernel invocation.
    row = jax.lax.broadcasted_iota(jnp.int32, (M, WC), 0)
    top_keep = (row % H != 0).astype(jnp.float32)        # row y-1 invalid at y==0
    bot_keep = (row % H != H - 1).astype(jnp.float32)    # row y+1 invalid at y==H-1
    zrow = jnp.zeros((1, WC), jnp.float32)

    def conv3(cur, w, bias):
        # Row-shifted slabs (SAME zero padding along height, per image).
        up = jnp.concatenate([zrow, cur[:M - 1, :]], axis=0) * top_keep  # y-1
        dn = jnp.concatenate([cur[1:, :], zrow], axis=0) * bot_keep      # y+1
        # Single fused-K matmul: (M, 3*WC) @ (3*WC, WC), bf16 in / f32 acc.
        lhs = jnp.concatenate([up, cur, dn], axis=1).astype(jnp.bfloat16)
        return jnp.dot(lhs, w, preferred_element_type=jnp.float32) + bias

    x0 = x_ref[...].reshape(M, WC).astype(jnp.float32)
    cur = x0
    # TODO(synk): switch to lax.fori_loop over blocks when NB grows past ~8.
    for i in range(num_blocks):
        h = conv3(cur, w1_ref[i], b1_ref[i])
        h = jnp.maximum(h, slope * h)                     # LeakyReLU(0.2)
        cur = conv3(h, w2_ref[i], b2_ref[i]) * res_scale + cur
    out = conv3(cur, wt_ref[...], bt_ref[...]) + x0       # tail + global residual
    o_ref[...] = out.reshape(BB, H, WC).astype(o_ref.dtype)


# ----------------------------------------------------------------------------
# Forward (Pallas): NCHW in, NCHW out
# ----------------------------------------------------------------------------
@functools.partial(jax.jit, static_argnames=("res_scale",))
def res_list_forward(x_nchw, folded, res_scale=1.0):
    B, C, H, W = x_nchw.shape
    WC = W * C
    NB = folded["w1"].shape[0]

    # NCHW -> NHWC -> lane-dense (B, H, W*C) slab (W*C = 128 here).
    x = jnp.transpose(x_nchw, (0, 2, 3, 1)).reshape(B, H, WC)

    # Batch chunking: raise the matmul M dimension toward 256 rows per step.
    rows_target = 256
    bb_target = max(1, -(-rows_target // H))
    BB = 1
    for cand in range(min(B, bb_target), 0, -1):
        if B % cand == 0:
            BB = cand
            break

    n_conv = 2 * NB + 1
    flops = 2 * B * H * (3 * WC) * WC * n_conv            # banded matmul flops
    bytes_accessed = (2 * x.size * 4                       # activations in+out (f32)
                      + (folded["w1"].size + folded["w2"].size
                         + folded["wt"].size) * 2          # bf16 weights, once
                      + (folded["b1"].size + folded["b2"].size
                         + folded["bt"].size) * 4)         # f32 biases, once

    kernel = functools.partial(reslist_kernel, num_blocks=NB,
                               res_scale=float(res_scale), slope=0.2)

    out = pl.pallas_call(
        kernel,
        out_shape=jax.ShapeDtypeStruct((B, H, WC), x.dtype),
        grid=(B // BB,),
        in_specs=[
            pl.BlockSpec((BB, H, WC), lambda i: (i, 0, 0)),          # activation
            # Grid-invariant weights/biases (constant index maps).
            # TODO(synk): add pipeline_mode=pl.Buffered(1) on v7x at large NB.
            pl.BlockSpec((NB, 3 * WC, WC), lambda i: (0, 0, 0)),     # conv1 W (bf16)
            pl.BlockSpec((NB, 1, WC), lambda i: (0, 0, 0)),          # conv1 b
            pl.BlockSpec((NB, 3 * WC, WC), lambda i: (0, 0, 0)),     # conv2 W (bf16)
            pl.BlockSpec((NB, 1, WC), lambda i: (0, 0, 0)),          # conv2 b
            pl.BlockSpec((3 * WC, WC), lambda i: (0, 0)),            # tail  W (bf16)
            pl.BlockSpec((1, WC), lambda i: (0, 0)),                 # tail  b
        ],
        out_specs=pl.BlockSpec((BB, H, WC), lambda i: (i, 0, 0)),
        compiler_params=pltpu.CompilerParams(
            dimension_semantics=("parallel",)),
        cost_estimate=pl.CostEstimate(flops=flops, transcendentals=0,
                                      bytes_accessed=bytes_accessed),
    )(x, folded["w1"], folded["b1"], folded["w2"], folded["b2"],
      folded["wt"], folded["bt"])

    # (B, H, W*C) -> NHWC -> NCHW
    return jnp.transpose(out.reshape(B, H, W, C), (0, 3, 1, 2))


# ----------------------------------------------------------------------------
# Pure-JAX reference (f32, for correctness check)
# ----------------------------------------------------------------------------
def _ref_conv(x, w, b):
    y = jax.lax.conv_general_dilated(
        x, w, (1, 1), "SAME",
        dimension_numbers=("NHWC", "HWIO", "NHWC"))
    return y + b


def ref_forward(x_nchw, params, res_scale=1.0):
    x = jnp.transpose(x_nchw, (0, 2, 3, 1))
    x1 = x
    for (w1, b1, w2, b2) in params["blocks"]:
        r = x
        h = _ref_conv(x, w1, b1)
        h = jnp.where(h >= 0, h, 0.2 * h)
        x = _ref_conv(h, w2, b2) * res_scale + r
    x = _ref_conv(x, params["tail_w"], params["tail_b"]) + x1
    return jnp.transpose(x, (0, 3, 1, 2))


# ----------------------------------------------------------------------------
# Deterministic parameter init
# ----------------------------------------------------------------------------
def init_params(key, num_res_blocks, n_feats):
    params = {"blocks": []}
    for _ in range(num_res_blocks):
        k1, k2, k3, k4, key = jax.random.split(key, 5)
        w1 = jax.random.normal(k1, (3, 3, n_feats, n_feats), jnp.float32) * 0.05
        b1 = jax.random.normal(k2, (n_feats,), jnp.float32) * 0.01
        w2 = jax.random.normal(k3, (3, 3, n_feats, n_feats), jnp.float32) * 0.05
        b2 = jax.random.normal(k4, (n_feats,), jnp.float32) * 0.01
        params["blocks"].append((w1, b1, w2, b2))
    k5, k6, key = jax.random.split(key, 3)
    params["tail_w"] = jax.random.normal(k5, (3, 3, n_feats, n_feats),
                                         jnp.float32) * 0.05
    params["tail_b"] = jax.random.normal(k6, (n_feats,), jnp.float32) * 0.01
    return params


if __name__ == "__main__":
    num_res_blocks = 2
    n_feats = 8
    B, H, W = 2, 16, 16          # W * n_feats = 128 -> lane-dense slabs
    res_scale = 1.0

    key = jax.random.PRNGKey(0)
    kx, kp = jax.random.split(key)
    x = jax.random.normal(kx, (B, n_feats, H, W), jnp.float32)  # NCHW input
    params = init_params(kp, num_res_blocks, n_feats)

    folded = fold_params(params, W)                      # fold weights ONCE
    out = res_list_forward(x, folded, res_scale=res_scale)
    out = jax.block_until_ready(out)

    ref = jax.block_until_ready(ref_forward(x, params, res_scale=res_scale))
    assert out.shape == (B, n_feats, H, W)
    # bf16 MXU inputs (f32 accumulation / residual path) -> ~1e-2-level error.
    err = float(jnp.max(jnp.abs(out - ref)))
    assert err < 1e-1, f"mismatch vs reference: max abs err = {err}"

    print("KERNEL_OK")
</pallas_src>

<mosaic_0001>
module attributes {stable_mosaic.version = 11 : i64} {
  func.func @reslist_kernel(%arg0: i32, %arg1: memref<2x16x128xf32, #tpu.memory_space<vmem>>, %arg2: memref<2x384x128xbf16, #tpu.memory_space<vmem>>, %arg3: memref<2x1x128xf32, #tpu.memory_space<vmem>>, %arg4: memref<2x384x128xbf16, #tpu.memory_space<vmem>>, %arg5: memref<2x1x128xf32, #tpu.memory_space<vmem>>, %arg6: memref<384x128xbf16, #tpu.memory_space<vmem>>, %arg7: memref<1x128xf32, #tpu.memory_space<vmem>>, %arg8: memref<2x16x128xf32, #tpu.memory_space<vmem>>) attributes {dimension_semantics = [#tpu.dimension_semantics<parallel>], iteration_bounds = array<i64: 1>, scalar_prefetch = 0 : i64, scratch_operands = 0 : i64, tpu.core_type = #tpu.core_type<tc>, window_params = [{transform_indices = @transform_0, window_bounds = array<i64: 2, 16, 128>}, {pipeline_mode = #tpu.pipeline_mode<synchronous>, transform_indices = @transform_1, window_bounds = array<i64: 2, 384, 128>}, {pipeline_mode = #tpu.pipeline_mode<synchronous>, transform_indices = @transform_2, window_bounds = array<i64: 2, 1, 128>}, {pipeline_mode = #tpu.pipeline_mode<synchronous>, transform_indices = @transform_3, window_bounds = array<i64: 2, 384, 128>}, {pipeline_mode = #tpu.pipeline_mode<synchronous>, transform_indices = @transform_4, window_bounds = array<i64: 2, 1, 128>}, {pipeline_mode = #tpu.pipeline_mode<synchronous>, transform_indices = @transform_5, window_bounds = array<i64: 384, 128>}, {pipeline_mode = #tpu.pipeline_mode<synchronous>, transform_indices = @transform_6, window_bounds = array<i64: 1, 128>}, {transform_indices = @transform_7, window_bounds = array<i64: 2, 16, 128>}]} {
    %0 = tpu.iota {dimensions = array<i32: 0>} : vector<32x128xi32>
    %c16_i32 = arith.constant 16 : i32
    %c0_i32 = arith.constant 0 : i32
    %1 = arith.cmpi eq, %c16_i32, %c0_i32 : i32
    %c1_i32 = arith.constant 1 : i32
    %2 = arith.select %1, %c1_i32, %c16_i32 : i32
    %3 = vector.broadcast %2 : i32 to vector<32x128xi32>
    %4 = arith.remsi %0, %3 : vector<32x128xi32>
    %c0_i32_0 = arith.constant 0 : i32
    %5 = vector.broadcast %c0_i32_0 : i32 to vector<32x128xi32>
    %6 = arith.cmpi ne, %4, %5 : vector<32x128xi32>
    %c0_i32_1 = arith.constant 0 : i32
    %7 = vector.broadcast %c0_i32_1 : i32 to vector<32x128xi32>
    %8 = arith.cmpi slt, %4, %7 : vector<32x128xi32>
    %c0_i32_2 = arith.constant 0 : i32
    %9 = arith.cmpi slt, %2, %c0_i32_2 : i32
    %10 = vector.broadcast %9 : i1 to vector<32x128xi1>
    %11 = vector.broadcast %10 : vector<32x128xi1> to vector<32x128xi1>
    %12 = arith.xori %8, %11 : vector<32x128xi1>
    %13 = arith.andi %12, %6 : vector<32x128xi1>
    %14 = vector.broadcast %2 : i32 to vector<32x128xi32>
    %15 = arith.addi %4, %14 : vector<32x128xi32>
    %16 = arith.select %13, %15, %4 : vector<32x128xi1>, vector<32x128xi32>
    %c0_i32_3 = arith.constant 0 : i32
    %17 = vector.broadcast %c0_i32_3 : i32 to vector<32x128xi32>
    %18 = arith.cmpi ne, %16, %17 : vector<32x128xi32>
    %19 = arith.extui %18 : vector<32x128xi1> to vector<32x128xi32>
    %20 = arith.sitofp %19 : vector<32x128xi32> to vector<32x128xf32>
    %c16_i32_4 = arith.constant 16 : i32
    %c0_i32_5 = arith.constant 0 : i32
    %21 = arith.cmpi eq, %c16_i32_4, %c0_i32_5 : i32
    %c1_i32_6 = arith.constant 1 : i32
    %22 = arith.select %21, %c1_i32_6, %c16_i32_4 : i32
    %23 = vector.broadcast %22 : i32 to vector<32x128xi32>
    %24 = arith.remsi %0, %23 : vector<32x128xi32>
    %c0_i32_7 = arith.constant 0 : i32
    %25 = vector.broadcast %c0_i32_7 : i32 to vector<32x128xi32>
    %26 = arith.cmpi ne, %24, %25 : vector<32x128xi32>
    %c0_i32_8 = arith.constant 0 : i32
    %27 = vector.broadcast %c0_i32_8 : i32 to vector<32x128xi32>
    %28 = arith.cmpi slt, %24, %27 : vector<32x128xi32>
    %c0_i32_9 = arith.constant 0 : i32
    %29 = arith.cmpi slt, %22, %c0_i32_9 : i32
    %30 = vector.broadcast %29 : i1 to vector<32x128xi1>
    %31 = vector.broadcast %30 : vector<32x128xi1> to vector<32x128xi1>
    %32 = arith.xori %28, %31 : vector<32x128xi1>
    %33 = arith.andi %32, %26 : vector<32x128xi1>
    %34 = vector.broadcast %22 : i32 to vector<32x128xi32>
    %35 = arith.addi %24, %34 : vector<32x128xi32>
    %36 = arith.select %33, %35, %24 : vector<32x128xi1>, vector<32x128xi32>
    %c15_i32 = arith.constant 15 : i32
    %37 = vector.broadcast %c15_i32 : i32 to vector<32x128xi32>
    %38 = arith.cmpi ne, %36, %37 : vector<32x128xi32>
    %39 = arith.extui %38 : vector<32x128xi1> to vector<32x128xi32>
    %40 = arith.sitofp %39 : vector<32x128xi32> to vector<32x128xf32>
    %cst = arith.constant 0.000000e+00 : f32
    %41 = vector.broadcast %cst : f32 to vector<1x128xf32>
    %c0 = arith.constant 0 : index
    %c0_10 = arith.constant 0 : index
    %c0_11 = arith.constant 0 : index
    %42 = vector.load %arg1[%c0, %c0_10, %c0_11] : memref<2x16x128xf32, #tpu.memory_space<vmem>>, vector<2x16x128xf32>
    %43 = vector.shape_cast %42 : vector<2x16x128xf32> to vector<32x128xf32>
    %c0_12 = arith.constant 0 : index
    %c0_13 = arith.constant 0 : index
    %c0_14 = arith.constant 0 : index
    %44 = vector.load %arg2[%c0_12, %c0_13, %c0_14] : memref<2x384x128xbf16, #tpu.memory_space<vmem>>, vector<1x384x128xbf16>
    %45 = vector.shape_cast %44 : vector<1x384x128xbf16> to vector<384x128xbf16>
    %c0_15 = arith.constant 0 : index
    %c0_16 = arith.constant 0 : index
    %c0_17 = arith.constant 0 : index
    %46 = vector.load %arg3[%c0_15, %c0_16, %c0_17] : memref<2x1x128xf32, #tpu.memory_space<vmem>>, vector<1x1x128xf32>
    %47 = vector.shape_cast %46 : vector<1x1x128xf32> to vector<1x128xf32>
    %48 = vector.extract_strided_slice %43 {offsets = [0, 0], sizes = [31, 128], strides = [1, 1]} : vector<32x128xf32> to vector<31x128xf32>
    %49 = tpu.concatenate %41, %48 in 0 : vector<1x128xf32>, vector<31x128xf32> -> vector<32x128xf32>
    %50 = arith.mulf %49, %20 : vector<32x128xf32>
    %51 = vector.extract_strided_slice %43 {offsets = [1, 0], sizes = [31, 128], strides = [1, 1]} : vector<32x128xf32> to vector<31x128xf32>
    %52 = tpu.concatenate %51, %41 in 0 : vector<31x128xf32>, vector<1x128xf32> -> vector<32x128xf32>
    %53 = arith.mulf %52, %40 : vector<32x128xf32>
    %54 = tpu.concatenate %50, %43, %53 in 1 : vector<32x128xf32>, vector<32x128xf32>, vector<32x128xf32> -> vector<32x384xf32>
    %55 = arith.truncf %54 : vector<32x384xf32> to vector<32x384xbf16>
    %cst_18 = arith.constant dense<0.000000e+00> : vector<32x128xf32>
    %56 = tpu.matmul %55, %45, %cst_18 {dimension_numbers = #tpu.dot_dimension_numbers<[1], [0], [0], [1], [0, 0, 1, 1], [], []>} : vector<32x384xbf16>, vector<384x128xbf16>, vector<32x128xf32> -> vector<32x128xf32>
    %57 = vector.broadcast %47 : vector<1x128xf32> to vector<32x128xf32>
    %58 = arith.addf %56, %57 : vector<32x128xf32>
    %cst_19 = arith.constant 2.000000e-01 : f32
    %59 = vector.broadcast %cst_19 : f32 to vector<32x128xf32>
    %60 = arith.mulf %59, %58 : vector<32x128xf32>
    %61 = arith.maximumf %58, %60 : vector<32x128xf32>
    %c0_20 = arith.constant 0 : index
    %c0_21 = arith.constant 0 : index
    %c0_22 = arith.constant 0 : index
    %62 = vector.load %arg4[%c0_20, %c0_21, %c0_22] : memref<2x384x128xbf16, #tpu.memory_space<vmem>>, vector<1x384x128xbf16>
    %63 = vector.shape_cast %62 : vector<1x384x128xbf16> to vector<384x128xbf16>
    %c0_23 = arith.constant 0 : index
    %c0_24 = arith.constant 0 : index
    %c0_25 = arith.constant 0 : index
    %64 = vector.load %arg5[%c0_23, %c0_24, %c0_25] : memref<2x1x128xf32, #tpu.memory_space<vmem>>, vector<1x1x128xf32>
    %65 = vector.shape_cast %64 : vector<1x1x128xf32> to vector<1x128xf32>
    %66 = vector.extract_strided_slice %61 {offsets = [0, 0], sizes = [31, 128], strides = [1, 1]} : vector<32x128xf32> to vector<31x128xf32>
    %67 = tpu.concatenate %41, %66 in 0 : vector<1x128xf32>, vector<31x128xf32> -> vector<32x128xf32>
    %68 = arith.mulf %67, %20 : vector<32x128xf32>
    %69 = vector.extract_strided_slice %61 {offsets = [1, 0], sizes = [31, 128], strides = [1, 1]} : vector<32x128xf32> to vector<31x128xf32>
    %70 = tpu.concatenate %69, %41 in 0 : vector<31x128xf32>, vector<1x128xf32> -> vector<32x128xf32>
    %71 = arith.mulf %70, %40 : vector<32x128xf32>
    %72 = tpu.concatenate %68, %61, %71 in 1 : vector<32x128xf32>, vector<32x128xf32>, vector<32x128xf32> -> vector<32x384xf32>
    %73 = arith.truncf %72 : vector<32x384xf32> to vector<32x384xbf16>
    %cst_26 = arith.constant dense<0.000000e+00> : vector<32x128xf32>
    %74 = tpu.matmul %73, %63, %cst_26 {dimension_numbers = #tpu.dot_dimension_numbers<[1], [0], [0], [1], [0, 0, 1, 1], [], []>} : vector<32x384xbf16>, vector<384x128xbf16>, vector<32x128xf32> -> vector<32x128xf32>
    %75 = vector.broadcast %65 : vector<1x128xf32> to vector<32x128xf32>
    %76 = arith.addf %74, %75 : vector<32x128xf32>
    %cst_27 = arith.constant 1.000000e+00 : f32
    %77 = vector.broadcast %cst_27 : f32 to vector<32x128xf32>
    %78 = arith.mulf %76, %77 : vector<32x128xf32>
    %79 = arith.addf %78, %43 : vector<32x128xf32>
    %c1 = arith.constant 1 : index
    %c0_28 = arith.constant 0 : index
    %c0_29 = arith.constant 0 : index
    %80 = vector.load %arg2[%c1, %c0_28, %c0_29] : memref<2x384x128xbf16, #tpu.memory_space<vmem>>, vector<1x384x128xbf16>
    %81 = vector.shape_cast %80 : vector<1x384x128xbf16> to vector<384x128xbf16>
    %c1_30 = arith.constant 1 : index
    %c0_31 = arith.constant 0 : index
    %c0_32 = arith.constant 0 : index
    %82 = vector.load %arg3[%c1_30, %c0_31, %c0_32] : memref<2x1x128xf32, #tpu.memory_space<vmem>>, vector<1x1x128xf32>
    %83 = vector.shape_cast %82 : vector<1x1x128xf32> to vector<1x128xf32>
    %84 = vector.extract_strided_slice %79 {offsets = [0, 0], sizes = [31, 128], strides = [1, 1]} : vector<32x128xf32> to vector<31x128xf32>
    %85 = tpu.concatenate %41, %84 in 0 : vector<1x128xf32>, vector<31x128xf32> -> vector<32x128xf32>
    %86 = arith.mulf %85, %20 : vector<32x128xf32>
    %87 = vector.extract_strided_slice %79 {offsets = [1, 0], sizes = [31, 128], strides = [1, 1]} : vector<32x128xf32> to vector<31x128xf32>
    %88 = tpu.concatenate %87, %41 in 0 : vector<31x128xf32>, vector<1x128xf32> -> vector<32x128xf32>
    %89 = arith.mulf %88, %40 : vector<32x128xf32>
    %90 = tpu.concatenate %86, %79, %89 in 1 : vector<32x128xf32>, vector<32x128xf32>, vector<32x128xf32> -> vector<32x384xf32>
    %91 = arith.truncf %90 : vector<32x384xf32> to vector<32x384xbf16>
    %cst_33 = arith.constant dense<0.000000e+00> : vector<32x128xf32>
    %92 = tpu.matmul %91, %81, %cst_33 {dimension_numbers = #tpu.dot_dimension_numbers<[1], [0], [0], [1], [0, 0, 1, 1], [], []>} : vector<32x384xbf16>, vector<384x128xbf16>, vector<32x128xf32> -> vector<32x128xf32>
    %93 = vector.broadcast %83 : vector<1x128xf32> to vector<32x128xf32>
    %94 = arith.addf %92, %93 : vector<32x128xf32>
    %cst_34 = arith.constant 2.000000e-01 : f32
    %95 = vector.broadcast %cst_34 : f32 to vector<32x128xf32>
    %96 = arith.mulf %95, %94 : vector<32x128xf32>
    %97 = arith.maximumf %94, %96 : vector<32x128xf32>
    %c1_35 = arith.constant 1 : index
    %c0_36 = arith.constant 0 : index
    %c0_37 = arith.constant 0 : index
    %98 = vector.load %arg4[%c1_35, %c0_36, %c0_37] : memref<2x384x128xbf16, #tpu.memory_space<vmem>>, vector<1x384x128xbf16>
    %99 = vector.shape_cast %98 : vector<1x384x128xbf16> to vector<384x128xbf16>
    %c1_38 = arith.constant 1 : index
    %c0_39 = arith.constant 0 : index
    %c0_40 = arith.constant 0 : index
    %100 = vector.load %arg5[%c1_38, %c0_39, %c0_40] : memref<2x1x128xf32, #tpu.memory_space<vmem>>, vector<1x1x128xf32>
    %101 = vector.shape_cast %100 : vector<1x1x128xf32> to vector<1x128xf32>
    %102 = vector.extract_strided_slice %97 {offsets = [0, 0], sizes = [31, 128], strides = [1, 1]} : vector<32x128xf32> to vector<31x128xf32>
    %103 = tpu.concatenate %41, %102 in 0 : vector<1x128xf32>, vector<31x128xf32> -> vector<32x128xf32>
    %104 = arith.mulf %103, %20 : vector<32x128xf32>
    %105 = vector.extract_strided_slice %97 {offsets = [1, 0], sizes = [31, 128], strides = [1, 1]} : vector<32x128xf32> to vector<31x128xf32>
    %106 = tpu.concatenate %105, %41 in 0 : vector<31x128xf32>, vector<1x128xf32> -> vector<32x128xf32>
    %107 = arith.mulf %106, %40 : vector<32x128xf32>
    %108 = tpu.concatenate %104, %97, %107 in 1 : vector<32x128xf32>, vector<32x128xf32>, vector<32x128xf32> -> vector<32x384xf32>
    %109 = arith.truncf %108 : vector<32x384xf32> to vector<32x384xbf16>
    %cst_41 = arith.constant dense<0.000000e+00> : vector<32x128xf32>
    %110 = tpu.matmul %109, %99, %cst_41 {dimension_numbers = #tpu.dot_dimension_numbers<[1], [0], [0], [1], [0, 0, 1, 1], [], []>} : vector<32x384xbf16>, vector<384x128xbf16>, vector<32x128xf32> -> vector<32x128xf32>
    %111 = vector.broadcast %101 : vector<1x128xf32> to vector<32x128xf32>
    %112 = arith.addf %110, %111 : vector<32x128xf32>
    %cst_42 = arith.constant 1.000000e+00 : f32
    %113 = vector.broadcast %cst_42 : f32 to vector<32x128xf32>
    %114 = arith.mulf %112, %113 : vector<32x128xf32>
    %115 = arith.addf %114, %79 : vector<32x128xf32>
    %c0_43 = arith.constant 0 : index
    %c0_44 = arith.constant 0 : index
    %116 = vector.load %arg6[%c0_43, %c0_44] : memref<384x128xbf16, #tpu.memory_space<vmem>>, vector<384x128xbf16>
    %c0_45 = arith.constant 0 : index
    %c0_46 = arith.constant 0 : index
    %117 = vector.load %arg7[%c0_45, %c0_46] : memref<1x128xf32, #tpu.memory_space<vmem>>, vector<1x128xf32>
    %118 = vector.extract_strided_slice %115 {offsets = [0, 0], sizes = [31, 128], strides = [1, 1]} : vector<32x128xf32> to vector<31x128xf32>
    %119 = tpu.concatenate %41, %118 in 0 : vector<1x128xf32>, vector<31x128xf32> -> vector<32x128xf32>
    %120 = arith.mulf %119, %20 : vector<32x128xf32>
    %121 = vector.extract_strided_slice %115 {offsets = [1, 0], sizes = [31, 128], strides = [1, 1]} : vector<32x128xf32> to vector<31x128xf32>
    %122 = tpu.concatenate %121, %41 in 0 : vector<31x128xf32>, vector<1x128xf32> -> vector<32x128xf32>
    %123 = arith.mulf %122, %40 : vector<32x128xf32>
    %124 = tpu.concatenate %120, %115, %123 in 1 : vector<32x128xf32>, vector<32x128xf32>, vector<32x128xf32> -> vector<32x384xf32>
    %125 = arith.truncf %124 : vector<32x384xf32> to vector<32x384xbf16>
    %cst_47 = arith.constant dense<0.000000e+00> : vector<32x128xf32>
    %126 = tpu.matmul %125, %116, %cst_47 {dimension_numbers = #tpu.dot_dimension_numbers<[1], [0], [0], [1], [0, 0, 1, 1], [], []>} : vector<32x384xbf16>, vector<384x128xbf16>, vector<32x128xf32> -> vector<32x128xf32>
    %127 = vector.broadcast %117 : vector<1x128xf32> to vector<32x128xf32>
    %128 = arith.addf %126, %127 : vector<32x128xf32>
    %129 = arith.addf %128, %43 : vector<32x128xf32>
    %130 = vector.shape_cast %129 : vector<32x128xf32> to vector<2x16x128xf32>
    %c0_48 = arith.constant 0 : index
    %c0_49 = arith.constant 0 : index
    %c0_50 = arith.constant 0 : index
    %131 = vector.load %arg8[%c0_48, %c0_49, %c0_50] : memref<2x16x128xf32, #tpu.memory_space<vmem>>, vector<2x16x128xf32>
    tpu.vector_store %arg8[%c0_48, %c0_49, %c0_50], %130 {strides = array<i32>} : memref<2x16x128xf32, #tpu.memory_space<vmem>>, vector<2x16x128xf32>,
    return
  }
  func.func @transform_0(%arg0: i32) -> (i32, i32, i32) {
    %c0_i32 = arith.constant 0 : i32
    %c0_i32_0 = arith.constant 0 : i32
    %c0_i32_1 = arith.constant 0 : i32
    return %arg0, %c0_i32, %c0_i32_0 : i32, i32, i32
  }
  func.func @transform_1(%arg0: i32) -> (i32, i32, i32) {
    %c0_i32 = arith.constant 0 : i32
    %c0_i32_0 = arith.constant 0 : i32
    %c0_i32_1 = arith.constant 0 : i32
    %c0_i32_2 = arith.constant 0 : i32
    return %c0_i32, %c0_i32_0, %c0_i32_1 : i32, i32, i32
  }
  func.func @transform_2(%arg0: i32) -> (i32, i32, i32) {
    %c0_i32 = arith.constant 0 : i32
    %c0_i32_0 = arith.constant 0 : i32
    %c0_i32_1 = arith.constant 0 : i32
    %c0_i32_2 = arith.constant 0 : i32
    return %c0_i32, %c0_i32_0, %c0_i32_1 : i32, i32, i32
  }
  func.func @transform_3(%arg0: i32) -> (i32, i32, i32) {
    %c0_i32 = arith.constant 0 : i32
    %c0_i32_0 = arith.constant 0 : i32
    %c0_i32_1 = arith.constant 0 : i32
    %c0_i32_2 = arith.constant 0 : i32
    return %c0_i32, %c0_i32_0, %c0_i32_1 : i32, i32, i32
  }
  func.func @transform_4(%arg0: i32) -> (i32, i32, i32) {
    %c0_i32 = arith.constant 0 : i32
    %c0_i32_0 = arith.constant 0 : i32
    %c0_i32_1 = arith.constant 0 : i32
    %c0_i32_2 = arith.constant 0 : i32
    return %c0_i32, %c0_i32_0, %c0_i32_1 : i32, i32, i32
  }
  func.func @transform_5(%arg0: i32) -> (i32, i32) {
    %c0_i32 = arith.constant 0 : i32
    %c0_i32_0 = arith.constant 0 : i32
    %c0_i32_1 = arith.constant 0 : i32
    return %c0_i32, %c0_i32_0 : i32, i32
  }
  func.func @transform_6(%arg0: i32) -> (i32, i32) {
    %c0_i32 = arith.constant 0 : i32
    %c0_i32_0 = arith.constant 0 : i32
    %c0_i32_1 = arith.constant 0 : i32
    return %c0_i32, %c0_i32_0 : i32, i32
  }
  func.func @transform_7(%arg0: i32) -> (i32, i32, i32) {
    %c0_i32 = arith.constant 0 : i32
    %c0_i32_0 = arith.constant 0 : i32
    %c0_i32_1 = arith.constant 0 : i32
    return %arg0, %c0_i32, %c0_i32_0 : i32, i32, i32
  }
}

</mosaic_0001>

<llo_original>
// kernel: res_list_forward.1
$region0: #{res_list_forward.1}
  #allocation0 [shape = 'u32[]', space=smem, size = 0x4, offset = 0x4, fixed_abs, tag = 'smem constant byte address 0x4 - core index']
  #allocation1 [shape = 'u32[144,128]{1,0:T(1,128)}', space=vmem, size = 0x12000, scoped, tag = 'internal scratch']
  %s0 = inlined_call_operand.vmem [shape: f32[2,16,128], index: 0, kind: input, shape index: {}]
  %s1 = inlined_call_operand.vmem [shape: bf16[2,384,128], index: 1, kind: input, shape index: {}]
  %s2 = inlined_call_operand.vmem [shape: f32[2,1,128], index: 2, kind: input, shape index: {}]
  %s3 = inlined_call_operand.vmem [shape: bf16[2,384,128], index: 3, kind: input, shape index: {}]
  %s4 = inlined_call_operand.vmem [shape: f32[2,1,128], index: 4, kind: input, shape index: {}]
  %s5 = inlined_call_operand.hbm [shape: bf16[384,128], index: 5, kind: input, shape index: {}]
  %s6 = inlined_call_operand.vmem [shape: f32[1,128], index: 6, kind: input, shape index: {}]
  %s7 = inlined_call_operand.vmem [shape: f32[2,16,128], index: 7, kind: output, shape index: {}]
  %s8 = sld [smem:[#allocation0]]
  $region42: #{res_list_forward.1} parent=0
    _
  %s10 = ssub.s32 1, %s8
  %s11 = scalar_select 0, %s10, %s8
  $region1: #{res_list_forward.1} parent=0
    #allocation2 [shape = 'u8[98304]{0}', space=vmem, size = 0x18000, scoped, tag = 'input window, operand 5, single buffered']
    #allocation3 [shape = 's32[1]{0}', space=sflag, size = 0x4, scoped, tag = 'scoped memory for res_list_forward.1']
    %12 = vsyncpa [#allocation3], 0
    // Predicated region
    $region2: #{res_list_forward.1} parent=1 // pred_check
      _
    $region3: #{res_list_forward.1} parent=1 // pred_check_branch
      %14 = sbr.rel (0) target = $region5
    $region4: #{res_list_forward.1} parent=1 // pred_region
      _
    $region5: #{res_list_forward.1} parent=1 // pred_fallthru
      _
    // Predicated region
    $region6: #{res_list_forward.1} parent=1 // pred_check
      _
    $region7: #{res_list_forward.1} parent=1 // pred_check_branch
      %16 = sbr.rel (0) target = $region9
    $region8: #{res_list_forward.1} parent=1 // pred_region
      _
    $region9: #{res_list_forward.1} parent=1 // pred_fallthru
      _
    // Predicated region
    $region10: #{res_list_forward.1} parent=1 // pred_check
      _
    $region11: #{res_list_forward.1} parent=1 // pred_check_branch
      %18 = sbr.rel (0) target = $region13
    $region12: #{res_list_forward.1} parent=1 // pred_region
      _
    $region13: #{res_list_forward.1} parent=1 // pred_fallthru
      _
    // Predicated region
    $region14: #{res_list_forward.1} parent=1 // pred_check
      _
    $region15: #{res_list_forward.1} parent=1 // pred_check_branch
      %20 = sbr.rel (0) target = $region17
    $region16: #{res_list_forward.1} parent=1 // pred_region
      _
    $region17: #{res_list_forward.1} parent=1 // pred_fallthru
      _
    // Predicated region
    $region18: #{res_list_forward.1} parent=1 // pred_check
      _
    $region19: #{res_list_forward.1} parent=1 // pred_check_branch
      %22 = sbr.rel (0) target = $region21
    $region20: #{res_list_forward.1} parent=1 // pred_region
      _
    $region21: #{res_list_forward.1} parent=1 // pred_fallthru
      _
    // Predicated region
    $region22: #{res_list_forward.1} parent=1 // pred_check
      _
    $region23: #{res_list_forward.1} parent=1 // pred_check_branch
      %24 = sbr.rel (0) target = $region25
    $region24: #{res_list_forward.1} parent=1 // pred_region
      %s26 = ssub.s32 3072, 3072
      %27 = vsyncadd [#allocation3], %s26
      %s28 = sshll.u32 [#allocation2], 4
      %s29 = int_to_ptr.vmem [resolvable:$true] %s28
      %34 = dma.hbm_to_vmem [thread:$0]  %s5, 3072, %s29, [#allocation3], 64, 64, 4
    $region25: #{res_list_forward.1} parent=1 // pred_fallthru
      _
    // Predicated region
    $region26: #{res_list_forward.1} parent=1 // pred_check
      _
    $region27: #{res_list_forward.1} parent=1 // pred_check_branch
      %36 = sbr.rel (0) target = $region29
    $region28: #{res_list_forward.1} parent=1 // pred_region
      _
    $region29: #{res_list_forward.1} parent=1 // pred_fallthru
      _
    // Predicated region
    $region30: #{res_list_forward.1} parent=1 // pred_check
      _
    $region31: #{res_list_forward.1} parent=1 // pred_check_branch
      %38 = sbr.rel (0) target = $region33
    $region32: #{res_list_forward.1} parent=1 // pred_region
      %39 = dma.done [#allocation3], 3072
    $region33: #{res_list_forward.1} parent=1 // pred_fallthru
      _
    %v41 = vlaneseq
    %v42 = vshrl.u32 %v41, 7
    %v43 = vadd.s32 %v42, 8
    %v44 = vadd.s32 %v42, 16
    %v45 = vadd.s32 %v42, 24
    %vm46 = vcmp.lt.s32.totalorder %v42, 0
    %v47 = vsub.s32 0, %v42
    %v48 = vsel %vm46, %v47, %v42
    %v49 = vshrl.u32 %v48, 4
    %v50 = vand.u32 %v48, 15
    %v51 = vsub.s32 0, %v50
    %v52 = vsel %vm46, %v51, %v50
    %vm53 = vcmp.lt.s32.totalorder %v43, 0
    %v54 = vsub.s32 0, %v43
    %v55 = vsel %vm53, %v54, %v43
    %v56 = vshrl.u32 %v55, 4
    %v57 = vand.u32 %v55, 15
    %v58 = vsub.s32 0, %v57
    %v59 = vsel %vm53, %v58, %v57
    %vm60 = vcmp.lt.s32.totalorder %v44, 0
    %v61 = vsub.s32 0, %v44
    %v62 = vsel %vm60, %v61, %v44
    %v63 = vshrl.u32 %v62, 4
    %v64 = vand.u32 %v62, 15
    %v65 = vsub.s32 0, %v64
    %v66 = vsel %vm60, %v65, %v64
    %vm67 = vcmp.lt.s32.totalorder %v45, 0
    %v68 = vsub.s32 0, %v45
    %v69 = vsel %vm67, %v68, %v45
    %v70 = vshrl.u32 %v69, 4
    %v71 = vand.u32 %v69, 15
    %v72 = vsub.s32 0, %v71
    %v73 = vsel %vm67, %v72, %v71
    %vm74 = vcmp.ne.s32.totalorder %v52, 0
    %vm75 = vcmp.ne.s32.totalorder %v59, 0
    %vm76 = vcmp.ne.s32.totalorder %v66, 0
    %vm77 = vcmp.ne.s32.totalorder %v73, 0
    %vm78 = vcmp.lt.s32.totalorder %v52, 0
    %vm79 = vcmp.lt.s32.totalorder %v59, 0
    %vm80 = vcmp.lt.s32.totalorder %v66, 0
    %vm81 = vcmp.lt.s32.totalorder %v73, 0
    %vm82 = vmand %vm78, %vm74
    %vm83 = vmand %vm79, %vm75
    %vm84 = vmand %vm80, %vm76
    %vm85 = vmand %vm81, %vm77
    %v86 = vadd.s32 %v52, 16
    %v87 = vadd.s32 %v59, 16
    %v88 = vadd.s32 %v66, 16
    %v89 = vadd.s32 %v73, 16
    %v90 = vsel %vm82, %v86, %v52
    %v91 = vsel %vm83, %v87, %v59
    %v92 = vsel %vm84, %v88, %v66
    %v93 = vsel %vm85, %v89, %v73
    %vm94 = vcmp.ne.s32.totalorder %v90, 0
    %vm95 = vcmp.ne.s32.totalorder %v91, 0
    %vm96 = vcmp.ne.s32.totalorder %v92, 0
    %vm97 = vcmp.ne.s32.totalorder %v93, 0
    %v98 = vsel %vm94, 1, 0
    %v99 = vsel %vm95, 1, 0
    %v100 = vsel %vm96, 1, 0
    %v101 = vsel %vm97, 1, 0
    %v102 = vcvt.s32.f32 %v98
    %v103 = vcvt.s32.f32 %v99
    %v104 = vcvt.s32.f32 %v100
    %v105 = vcvt.s32.f32 %v101
    %vm106 = vcmp.ne.s32.totalorder %v90, 15
    %vm107 = vcmp.ne.s32.totalorder %v91, 15
    %vm108 = vcmp.ne.s32.totalorder %v92, 15
    %vm109 = vcmp.ne.s32.totalorder %v93, 15
    %v110 = vsel %vm106, 1, 0
    %v111 = vsel %vm107, 1, 0
    %v112 = vsel %vm108, 1, 0
    %v113 = vsel %vm109, 1, 0
    %v114 = vcvt.s32.f32 %v110
    %v115 = vcvt.s32.f32 %v111
    %v116 = vcvt.s32.f32 %v112
    %v117 = vcvt.s32.f32 %v113
    %v118 = vld [vmem:[%s0] sm:$0xff]
    %v119 = vld [vmem:[%s0 + $0x8] sm:$0xff]
    %v120 = vld [vmem:[%s0 + $0x10] sm:$0xff]
    %v121 = vld [vmem:[%s0 + $0x18] sm:$0xff]
    %v122 = vld [vmem:[%s1] sm:$0xf]
    %v123 = vld [vmem:[%s1 + $0x4] sm:$0xf]
    %v124 = vld [vmem:[%s1 + $0x8] sm:$0xf]
    %v125 = vld [vmem:[%s1 + $0xc] sm:$0xf]
    %v126 = vld [vmem:[%s1 + $0x10] sm:$0xf]
    %v127 = vld [vmem:[%s1 + $0x14] sm:$0xf]
    %v128 = vld [vmem:[%s1 + $0x18] sm:$0xf]
    %v129 = vld [vmem:[%s1 + $0x1c] sm:$0xf]
    %v130 = vld [vmem:[%s1 + $0x20] sm:$0xf]
    %v131 = vld [vmem:[%s1 + $0x24] sm:$0xf]
    %v132 = vld [vmem:[%s1 + $0x28] sm:$0xf]
    %v133 = vld [vmem:[%s1 + $0x2c] sm:$0xf]
    %v134 = vld [vmem:[%s1 + $0x30] sm:$0xf]
    %v135 = vld [vmem:[%s1 + $0x34] sm:$0xf]
    %v136 = vld [vmem:[%s1 + $0x38] sm:$0xf]
    %v137 = vld [vmem:[%s1 + $0x3c] sm:$0xf]
    %v138 = vld [vmem:[%s1 + $0x40] sm:$0xf]
    %v139 = vld [vmem:[%s1 + $0x44] sm:$0xf]
    %v140 = vld [vmem:[%s1 + $0x48] sm:$0xf]
    %v141 = vld [vmem:[%s1 + $0x4c] sm:$0xf]
    %v142 = vld [vmem:[%s1 + $0x50] sm:$0xf]
    %v143 = vld [vmem:[%s1 + $0x54] sm:$0xf]
    %v144 = vld [vmem:[%s1 + $0x58] sm:$0xf]
    %v145 = vld [vmem:[%s1 + $0x5c] sm:$0xf]
    %v146 = vld [vmem:[%s1 + $0x60] sm:$0xf]
    %v147 = vld [vmem:[%s1 + $0x64] sm:$0xf]
    %v148 = vld [vmem:[%s1 + $0x68] sm:$0xf]
    %v149 = vld [vmem:[%s1 + $0x6c] sm:$0xf]
    %v150 = vld [vmem:[%s1 + $0x70] sm:$0xf]
    %v151 = vld [vmem:[%s1 + $0x74] sm:$0xf]
    %v152 = vld [vmem:[%s1 + $0x78] sm:$0xf]
    %v153 = vld [vmem:[%s1 + $0x7c] sm:$0xf]
    %v154 = vld [vmem:[%s1 + $0x80] sm:$0xf]
    %v155 = vld [vmem:[%s1 + $0x84] sm:$0xf]
    %v156 = vld [vmem:[%s1 + $0x88] sm:$0xf]
    %v157 = vld [vmem:[%s1 + $0x8c] sm:$0xf]
    %v158 = vld [vmem:[%s1 + $0x90] sm:$0xf]
    %v159 = vld [vmem:[%s1 + $0x94] sm:$0xf]
    %v160 = vld [vmem:[%s1 + $0x98] sm:$0xf]
    %v161 = vld [vmem:[%s1 + $0x9c] sm:$0xf]
    %v162 = vld [vmem:[%s1 + $0xa0] sm:$0xf]
    %v163 = vld [vmem:[%s1 + $0xa4] sm:$0xf]
    %v164 = vld [vmem:[%s1 + $0xa8] sm:$0xf]
    %v165 = vld [vmem:[%s1 + $0xac] sm:$0xf]
    %v166 = vld [vmem:[%s1 + $0xb0] sm:$0xf]
    %v167 = vld [vmem:[%s1 + $0xb4] sm:$0xf]
    %v168 = vld [vmem:[%s1 + $0xb8] sm:$0xf]
    %v169 = vld [vmem:[%s1 + $0xbc] sm:$0xf]
    %v170 = vld [vmem:[%s2] sm:$0x1]
    %vm175 = vcmask 1040384
    %v176 = vrot.slane %v118, 7
    %v177 = vrot.slane %v119, 7
    %v178 = vsel %vm175, %v176, %v177
    %v179 = vrot.slane %v120, 7
    %v180 = vsel %vm175, %v177, %v179
    %v181 = vrot.slane %v121, 7
    %v182 = vsel %vm175, %v179, %v181
    %v187 = vsel %vm175, 0.0, %v176
    %v188 = vmul.f32 %v187, %v102
    %v189 = vmul.f32 %v178, %v103
    %v190 = vmul.f32 %v180, %v104
    %v191 = vmul.f32 %v182, %v105
    %vm192 = vcmask 1046528
    %v193 = vrot.slane %v118, 1
    %v194 = vrot.slane %v119, 1
    %v195 = vsel %vm192, %v193, %v194
    %v196 = vrot.slane %v120, 1
    %v197 = vsel %vm192, %v194, %v196
    %v198 = vrot.slane %v121, 1
    %v199 = vsel %vm192, %v196, %v198
    %v204 = vsel %vm192, %v198, 0.0
    %v205 = vmul.f32 %v195, %v114
    %v206 = vmul.f32 %v197, %v115
    %v207 = vmul.f32 %v199, %v116
    %v208 = vmul.f32 %v204, %v117
    %v209 = vpack.c.bf16 %v189, %v188
    %v210 = vpack.c.bf16 %v119, %v118
    %v211 = vpack.c.bf16 %v206, %v205
    %v212 = vpack.c.bf16 %v191, %v190
    %v213 = vpack.c.bf16 %v121, %v120
    %v214 = vpack.c.bf16 %v208, %v207
    %v216 = vlaneseq
    %v217 = vshrl.u32 %v216, 7
    %v218 = vsub.s32 0, %v217
    %v219 = vrot.slane %v170, %v218
    %v269 = vunpack.c.l.b16 %v122
    %v270 = vunpack.c.l.b16 %v123
    %v271 = vunpack.c.l.b16 %v124
    %v272 = vunpack.c.l.b16 %v125
    %v273 = vunpack.c.l.b16 %v126
    %v274 = vunpack.c.l.b16 %v127
    %v275 = vunpack.c.l.b16 %v128
    %v276 = vunpack.c.l.b16 %v129
    %v277 = vunpack.c.l.b16 %v130
    %v278 = vunpack.c.l.b16 %v131
    %v279 = vunpack.c.l.b16 %v132
    %v280 = vunpack.c.l.b16 %v133
    %v281 = vunpack.c.l.b16 %v134
    %v282 = vunpack.c.l.b16 %v135
    %v283 = vunpack.c.l.b16 %v136
    %v284 = vunpack.c.l.b16 %v137
    %v285 = vunpack.c.l.b16 %v138
    %v286 = vunpack.c.l.b16 %v139
    %v287 = vunpack.c.l.b16 %v140
    %v288 = vunpack.c.l.b16 %v141
    %v289 = vunpack.c.l.b16 %v142
    %v290 = vunpack.c.l.b16 %v143
    %v291 = vunpack.c.l.b16 %v144
    %v292 = vunpack.c.l.b16 %v145
    %v293 = vunpack.c.l.b16 %v146
    %v294 = vunpack.c.l.b16 %v147
    %v295 = vunpack.c.l.b16 %v148
    %v296 = vunpack.c.l.b16 %v149
    %v297 = vunpack.c.l.b16 %v150
    %v298 = vunpack.c.l.b16 %v151
    %v299 = vunpack.c.l.b16 %v152
    %v300 = vunpack.c.l.b16 %v153
    %v301 = vunpack.c.l.b16 %v154
    %v302 = vunpack.c.l.b16 %v155
    %v303 = vunpack.c.l.b16 %v156
    %v304 = vunpack.c.l.b16 %v157
    %v305 = vunpack.c.l.b16 %v158
    %v306 = vunpack.c.l.b16 %v159
    %v307 = vunpack.c.l.b16 %v160
    %v308 = vunpack.c.l.b16 %v161
    %v309 = vunpack.c.l.b16 %v162
    %v310 = vunpack.c.l.b16 %v163
    %v311 = vunpack.c.l.b16 %v164
    %v312 = vunpack.c.l.b16 %v165
    %v313 = vunpack.c.l.b16 %v166
    %v314 = vunpack.c.l.b16 %v167
    %v315 = vunpack.c.l.b16 %v168
    %v316 = vunpack.c.l.b16 %v169
    %v317 = vpack.c.b16 %v270, %v269
    %v318 = vpack.c.b16 %v272, %v271
    %v319 = vpack.c.b16 %v274, %v273
    %v320 = vpack.c.b16 %v276, %v275
    %v321 = vpack.c.b16 %v278, %v277
    %v322 = vpack.c.b16 %v280, %v279
    %v323 = vpack.c.b16 %v282, %v281
    %v324 = vpack.c.b16 %v284, %v283
    %v325 = vpack.c.b16 %v286, %v285
    %v326 = vpack.c.b16 %v288, %v287
    %v327 = vpack.c.b16 %v290, %v289
    %v328 = vpack.c.b16 %v292, %v291
    %v329 = vpack.c.b16 %v294, %v293
    %v330 = vpack.c.b16 %v296, %v295
    %v331 = vpack.c.b16 %v298, %v297
    %v332 = vpack.c.b16 %v300, %v299
    %v333 = vpack.c.b16 %v302, %v301
    %v334 = vpack.c.b16 %v304, %v303
    %v335 = vpack.c.b16 %v306, %v305
    %v336 = vpack.c.b16 %v308, %v307
    %v337 = vpack.c.b16 %v310, %v309
    %v338 = vpack.c.b16 %v312, %v311
    %v339 = vpack.c.b16 %v314, %v313
    %v340 = vpack.c.b16 %v316, %v315
    %365 = vmatprep.subr.bf16.mxu0 0
    %366 = vmatpush1.bf16.msra.mxu0 %v317
    %367 = vmatprep.subr.bf16.mxu0 0
    %368 = vmatpush1.bf16.msra.mxu0 %v318
    %369 = vmatprep.subr.bf16.mxu0 0
    %370 = vmatpush1.bf16.msra.mxu0 %v319
    %371 = vmatprep.subr.bf16.mxu0 0
    %372 = vmatpush1.bf16.msra.mxu0 %v320
    %373 = vmatprep.subr.bf16.mxu0 0
    %374 = vmatpush1.bf16.msra.mxu0 %v321
    %375 = vmatprep.subr.bf16.mxu0 0
    %376 = vmatpush1.bf16.msra.mxu0 %v322
    %377 = vmatprep.subr.bf16.mxu0 0
    %378 = vmatpush1.bf16.msra.mxu0 %v323
    %379 = vmatprep.subr.bf16.mxu0 0
    %380 = vmatpush1.bf16.msra.mxu0 %v324
    %381 = vmatprep.subr.bf16.mxu0 0
    %382 = vmatpush1.bf16.msra.mxu0 %v325
    %383 = vmatprep.subr.bf16.mxu0 0
    %384 = vmatpush1.bf16.msra.mxu0 %v326
    %385 = vmatprep.subr.bf16.mxu0 0
    %386 = vmatpush1.bf16.msra.mxu0 %v327
    %387 = vmatprep.subr.bf16.mxu0 0
    %388 = vmatpush1.bf16.msra.mxu0 %v328
    %389 = vmatprep.subr.bf16.mxu0 0
    %390 = vmatpush1.bf16.msra.mxu0 %v329
    %391 = vmatprep.subr.bf16.mxu0 0
    %392 = vmatpush1.bf16.msra.mxu0 %v330
    %393 = vmatprep.subr.bf16.mxu0 0
    %394 = vmatpush1.bf16.msra.mxu0 %v331
    %395 = vmatprep.subr.bf16.mxu0 0
    %396 = vmatpush1.bf16.msra.mxu0 %v332
    %397 = vmatprep.mubr.bf16.mxu0 %v210
    %398 = vmatmul.mubr.bf16.gmra.mrb[0].mxu0 %v209
    %v399 = vpop.f32.mrb[0].mxu0
    %v400 = vadd.f32 %v219, %v399
    %v401 = vpop.f32.mrb[0].mxu0
    %v402 = vpop.f32.mrb[0].mxu0
    %v403 = vadd.f32 %v219, %v402
    %v404 = vpop.f32.mrb[0].mxu0
    %405 = vmatprep.mubr.bf16.mxu0 %v213
    %406 = vmatmul.mubr.bf16.gmra.mrb[0].mxu0 %v212
    %v407 = vpop.f32.mrb[0].mxu0
    %v408 = vadd.f32 %v219, %v407
    %v409 = vpop.f32.mrb[0].mxu0
    %v410 = vpop.f32.mrb[0].mxu0
    %v411 = vadd.f32 %v219, %v410
    %v412 = vpop.f32.mrb[0].mxu0
    %413 = vdwg.mxu0
    %414 = vmatprep.subr.bf16.mxu0 0
    %415 = vmatpush1.bf16.msra.mxu0 %v333
    %416 = vmatprep.subr.bf16.mxu0 0
    %417 = vmatpush1.bf16.msra.mxu0 %v334
    %418 = vmatprep.subr.bf16.mxu0 0
    %419 = vmatpush1.bf16.msra.mxu0 %v335
    %420 = vmatprep.subr.bf16.mxu0 0
    %421 = vmatpush1.bf16.msra.mxu0 %v336
    %422 = vmatprep.subr.bf16.mxu0 0
    %423 = vmatpush1.bf16.msra.mxu0 %v337
    %424 = vmatprep.subr.bf16.mxu0 0
    %425 = vmatpush1.bf16.msra.mxu0 %v338
    %426 = vmatprep.subr.bf16.mxu0 0
    %427 = vmatpush1.bf16.msra.mxu0 %v339
    %428 = vmatprep.subr.bf16.mxu0 0
    %429 = vmatpush1.bf16.msra.mxu0 %v340
    %430 = vmatprep.subr.bf16.mxu0 0
    %431 = vmatpush1.bf16.msra.mxu0 0
    %432 = vmatprep.subr.bf16.mxu0 0
    %433 = vmatpush1.bf16.msra.mxu0 0
    %434 = vmatprep.subr.bf16.mxu0 0
    %435 = vmatpush1.bf16.msra.mxu0 0
    %436 = vmatprep.subr.bf16.mxu0 0
    %437 = vmatpush1.bf16.msra.mxu0 0
    %438 = vmatprep.subr.bf16.mxu0 0
    %439 = vmatpush1.bf16.msra.mxu0 0
    %440 = vmatprep.subr.bf16.mxu0 0
    %441 = vmatpush1.bf16.msra.mxu0 0
    %442 = vmatprep.subr.bf16.mxu0 0
    %443 = vmatpush1.bf16.msra.mxu0 0
    %444 = vmatprep.subr.bf16.mxu0 0
    %445 = vmatpush1.bf16.msra.mxu0 0
    %446 = vmatprep.mubr.bf16.mxu0 0
    %447 = vmatmul.mubr.bf16.gmra.mrb[0].mxu0 %v211
    %v448 = vpop.f32.mrb[0].mxu0
    %v449 = vadd.f32 %v400, %v448
    %v450 = vpop.f32.mrb[0].mxu0
    %v451 = vpop.f32.mrb[0].mxu0
    %v452 = vadd.f32 %v403, %v451
    %v453 = vpop.f32.mrb[0].mxu0
    %454 = vmatprep.mubr.bf16.mxu0 0
    %455 = vmatmul.mubr.bf16.gmra.mrb[0].mxu0 %v214
    %v456 = vpop.f32.mrb[0].mxu0
    %v457 = vadd.f32 %v408, %v456
    %v458 = vpop.f32.mrb[0].mxu0
    %v459 = vpop.f32.mrb[0].mxu0
    %v460 = vadd.f32 %v411, %v459
    %v461 = vpop.f32.mrb[0].mxu0
    %462 = vdwg.mxu0
    %v463 = vmul.f32 %v449, 0.2
    %v464 = vmul.f32 %v452, 0.2
    %v465 = vmul.f32 %v457, 0.2
    %v466 = vmul.f32 %v460, 0.2
    %v467 = vmax.f32 %v449, %v463
    %v468 = vmax.f32 %v452, %v464
    %v469 = vmax.f32 %v457, %v465
    %v470 = vmax.f32 %v460, %v466
    %v471 = vld [vmem:[%s3] sm:$0xf]
    %v472 = vld [vmem:[%s3 + $0x4] sm:$0xf]
    %v473 = vld [vmem:[%s3 + $0x8] sm:$0xf]
    %v474 = vld [vmem:[%s3 + $0xc] sm:$0xf]
    %v475 = vld [vmem:[%s3 + $0x10] sm:$0xf]
    %v476 = vld [vmem:[%s3 + $0x14] sm:$0xf]
    %v477 = vld [vmem:[%s3 + $0x18] sm:$0xf]
    %v478 = vld [vmem:[%s3 + $0x1c] sm:$0xf]
    %v479 = vld [vmem:[%s3 + $0x20] sm:$0xf]
    %v480 = vld [vmem:[%s3 + $0x24] sm:$0xf]
    %v481 = vld [vmem:[%s3 + $0x28] sm:$0xf]
    %v482 = vld [vmem:[%s3 + $0x2c] sm:$0xf]
    %v483 = vld [vmem:[%s3 + $0x30] sm:$0xf]
    %v484 = vld [vmem:[%s3 + $0x34] sm:$0xf]
    %v485 = vld [vmem:[%s3 + $0x38] sm:$0xf]
    %v486 = vld [vmem:[%s3 + $0x3c] sm:$0xf]
    %v487 = vld [vmem:[%s3 + $0x40] sm:$0xf]
    %v488 = vld [vmem:[%s3 + $0x44] sm:$0xf]
    %v489 = vld [vmem:[%s3 + $0x48] sm:$0xf]
    %v490 = vld [vmem:[%s3 + $0x4c] sm:$0xf]
    %v491 = vld [vmem:[%s3 + $0x50] sm:$0xf]
    %v492 = vld [vmem:[%s3 + $0x54] sm:$0xf]
    %v493 = vld [vmem:[%s3 + $0x58] sm:$0xf]
    %v494 = vld [vmem:[%s3 + $0x5c] sm:$0xf]
    %v495 = vld [vmem:[%s3 + $0x60] sm:$0xf]
    %v496 = vld [vmem:[%s3 + $0x64] sm:$0xf]
    %v497 = vld [vmem:[%s3 + $0x68] sm:$0xf]
    %v498 = vld [vmem:[%s3 + $0x6c] sm:$0xf]
    %v499 = vld [vmem:[%s3 + $0x70] sm:$0xf]
    %v500 = vld [vmem:[%s3 + $0x74] sm:$0xf]
    %v501 = vld [vmem:[%s3 + $0x78] sm:$0xf]
    %v502 = vld [vmem:[%s3 + $0x7c] sm:$0xf]
    %v503 = vld [vmem:[%s3 + $0x80] sm:$0xf]
    %v504 = vld [vmem:[%s3 + $0x84] sm:$0xf]
    %v505 = vld [vmem:[%s3 + $0x88] sm:$0xf]
    %v506 = vld [vmem:[%s3 + $0x8c] sm:$0xf]
    %v507 = vld [vmem:[%s3 + $0x90] sm:$0xf]
    %v508 = vld [vmem:[%s3 + $0x94] sm:$0xf]
    %v509 = vld [vmem:[%s3 + $0x98] sm:$0xf]
    %v510 = vld [vmem:[%s3 + $0x9c] sm:$0xf]
    %v511 = vld [vmem:[%s3 + $0xa0] sm:$0xf]
    %v512 = vld [vmem:[%s3 + $0xa4] sm:$0xf]
    %v513 = vld [vmem:[%s3 + $0xa8] sm:$0xf]
    %v514 = vld [vmem:[%s3 + $0xac] sm:$0xf]
    %v515 = vld [vmem:[%s3 + $0xb0] sm:$0xf]
    %v516 = vld [vmem:[%s3 + $0xb4] sm:$0xf]
    %v517 = vld [vmem:[%s3 + $0xb8] sm:$0xf]
    %v518 = vld [vmem:[%s3 + $0xbc] sm:$0xf]
    %v519 = vld [vmem:[%s4] sm:$0x1]
    %v524 = vrot.slane %v467, 7
    %v525 = vrot.slane %v468, 7
    %v526 = vsel %vm175, %v524, %v525
    %v527 = vrot.slane %v469, 7
    %v528 = vsel %vm175, %v525, %v527
    %v529 = vrot.slane %v470, 7
    %v530 = vsel %vm175, %v527, %v529
    %v535 = vsel %vm175, 0.0, %v524
    %v536 = vmul.f32 %v535, %v102
    %v537 = vmul.f32 %v526, %v103
    %v538 = vmul.f32 %v528, %v104
    %v539 = vmul.f32 %v530, %v105
    %v540 = vrot.slane %v467, 1
    %v541 = vrot.slane %v468, 1
    %v542 = vsel %vm192, %v540, %v541
    %v543 = vrot.slane %v469, 1
    %v544 = vsel %vm192, %v541, %v543
    %v545 = vrot.slane %v470, 1
    %v546 = vsel %vm192, %v543, %v545
    %v551 = vsel %vm192, %v545, 0.0
    %v552 = vmul.f32 %v542, %v114
    %v553 = vmul.f32 %v544, %v115
    %v554 = vmul.f32 %v546, %v116
    %v555 = vmul.f32 %v551, %v117
    %v556 = vpack.c.bf16 %v537, %v536
    %v557 = vpack.c.bf16 %v468, %v467
    %v558 = vpack.c.bf16 %v553, %v552
    %v559 = vpack.c.bf16 %v539, %v538
    %v560 = vpack.c.bf16 %v470, %v469
    %v561 = vpack.c.bf16 %v555, %v554
    %v563 = vlaneseq
    %v564 = vshrl.u32 %v563, 7
    %v565 = vsub.s32 0, %v564
    %v566 = vrot.slane %v519, %v565
    %v616 = vunpack.c.l.b16 %v471
    %v617 = vunpack.c.l.b16 %v472
    %v618 = vunpack.c.l.b16 %v473
    %v619 = vunpack.c.l.b16 %v474
    %v620 = vunpack.c.l.b16 %v475
    %v621 = vunpack.c.l.b16 %v476
    %v622 = vunpack.c.l.b16 %v477
    %v623 = vunpack.c.l.b16 %v478
    %v624 = vunpack.c.l.b16 %v479
    %v625 = vunpack.c.l.b16 %v480
    %v626 = vunpack.c.l.b16 %v481
    %v627 = vunpack.c.l.b16 %v482
    %v628 = vunpack.c.l.b16 %v483
    %v629 = vunpack.c.l.b16 %v484
    %v630 = vunpack.c.l.b16 %v485
    %v631 = vunpack.c.l.b16 %v486
    %v632 = vunpack.c.l.b16 %v487
    %v633 = vunpack.c.l.b16 %v488
    %v634 = vunpack.c.l.b16 %v489
    %v635 = vunpack.c.l.b16 %v490
    %v636 = vunpack.c.l.b16 %v491
    %v637 = vunpack.c.l.b16 %v492
    %v638 = vunpack.c.l.b16 %v493
    %v639 = vunpack.c.l.b16 %v494
    %v640 = vunpack.c.l.b16 %v495
    %v641 = vunpack.c.l.b16 %v496
    %v642 = vunpack.c.l.b16 %v497
    %v643 = vunpack.c.l.b16 %v498
    %v644 = vunpack.c.l.b16 %v499
    %v645 = vunpack.c.l.b16 %v500
    %v646 = vunpack.c.l.b16 %v501
    %v647 = vunpack.c.l.b16 %v502
    %v648 = vunpack.c.l.b16 %v503
    %v649 = vunpack.c.l.b16 %v504
    %v650 = vunpack.c.l.b16 %v505
    %v651 = vunpack.c.l.b16 %v506
    %v652 = vunpack.c.l.b16 %v507
    %v653 = vunpack.c.l.b16 %v508
    %v654 = vunpack.c.l.b16 %v509
    %v655 = vunpack.c.l.b16 %v510
    %v656 = vunpack.c.l.b16 %v511
    %v657 = vunpack.c.l.b16 %v512
    %v658 = vunpack.c.l.b16 %v513
    %v659 = vunpack.c.l.b16 %v514
    %v660 = vunpack.c.l.b16 %v515
    %v661 = vunpack.c.l.b16 %v516
    %v662 = vunpack.c.l.b16 %v517
    %v663 = vunpack.c.l.b16 %v518
    %v664 = vpack.c.b16 %v617, %v616
    %v665 = vpack.c.b16 %v619, %v618
    %v666 = vpack.c.b16 %v621, %v620
    %v667 = vpack.c.b16 %v623, %v622
    %v668 = vpack.c.b16 %v625, %v624
    %v669 = vpack.c.b16 %v627, %v626
    %v670 = vpack.c.b16 %v629, %v628
    %v671 = vpack.c.b16 %v631, %v630
    %v672 = vpack.c.b16 %v633, %v632
    %v673 = vpack.c.b16 %v635, %v634
    %v674 = vpack.c.b16 %v637, %v636
    %v675 = vpack.c.b16 %v639, %v638
    %v676 = vpack.c.b16 %v641, %v640
    %v677 = vpack.c.b16 %v643, %v642
    %v678 = vpack.c.b16 %v645, %v644
    %v679 = vpack.c.b16 %v647, %v646
    %v680 = vpack.c.b16 %v649, %v648
    %v681 = vpack.c.b16 %v651, %v650
    %v682 = vpack.c.b16 %v653, %v652
    %v683 = vpack.c.b16 %v655, %v654
    %v684 = vpack.c.b16 %v657, %v656
    %v685 = vpack.c.b16 %v659, %v658
    %v686 = vpack.c.b16 %v661, %v660
    %v687 = vpack.c.b16 %v663, %v662
    %712 = vmatprep.subr.bf16.mxu0 0
    %713 = vmatpush1.bf16.msra.mxu0 %v664
    %714 = vmatprep.subr.bf16.mxu0 0
    %715 = vmatpush1.bf16.msra.mxu0 %v665
    %716 = vmatprep.subr.bf16.mxu0 0
    %717 = vmatpush1.bf16.msra.mxu0 %v666
    %718 = vmatprep.subr.bf16.mxu0 0
    %719 = vmatpush1.bf16.msra.mxu0 %v667
    %720 = vmatprep.subr.bf16.mxu0 0
    %721 = vmatpush1.bf16.msra.mxu0 %v668
    %722 = vmatprep.subr.bf16.mxu0 0
    %723 = vmatpush1.bf16.msra.mxu0 %v669
    %724 = vmatprep.subr.bf16.mxu0 0
    %725 = vmatpush1.bf16.msra.mxu0 %v670
    %726 = vmatprep.subr.bf16.mxu0 0
    %727 = vmatpush1.bf16.msra.mxu0 %v671
    %728 = vmatprep.subr.bf16.mxu0 0
    %729 = vmatpush1.bf16.msra.mxu0 %v672
    %730 = vmatprep.subr.bf16.mxu0 0
    %731 = vmatpush1.bf16.msra.mxu0 %v673
    %732 = vmatprep.subr.bf16.mxu0 0
    %733 = vmatpush1.bf16.msra.mxu0 %v674
    %734 = vmatprep.subr.bf16.mxu0 0
    %735 = vmatpush1.bf16.msra.mxu0 %v675
    %736 = vmatprep.subr.bf16.mxu0 0
    %737 = vmatpush1.bf16.msra.mxu0 %v676
    %738 = vmatprep.subr.bf16.mxu0 0
    %739 = vmatpush1.bf16.msra.mxu0 %v677
    %740 = vmatprep.subr.bf16.mxu0 0
    %741 = vmatpush1.bf16.msra.mxu0 %v678
    %742 = vmatprep.subr.bf16.mxu0 0
    %743 = vmatpush1.bf16.msra.mxu0 %v679
    %744 = vmatprep.mubr.bf16.mxu0 %v557
    %745 = vmatmul.mubr.bf16.gmra.mrb[0].mxu0 %v556
    %v746 = vpop.f32.mrb[0].mxu0
    %v747 = vadd.f32 %v566, %v746
    %v748 = vpop.f32.mrb[0].mxu0
    %v749 = vpop.f32.mrb[0].mxu0
    %v750 = vadd.f32 %v566, %v749
    %v751 = vpop.f32.mrb[0].mxu0
    %752 = vmatprep.mubr.bf16.mxu0 %v560
    %753 = vmatmul.mubr.bf16.gmra.mrb[0].mxu0 %v559
    %v754 = vpop.f32.mrb[0].mxu0
    %v755 = vadd.f32 %v566, %v754
    %v756 = vpop.f32.mrb[0].mxu0
    %v757 = vpop.f32.mrb[0].mxu0
    %v758 = vadd.f32 %v566, %v757
    %v759 = vpop.f32.mrb[0].mxu0
    %760 = vdwg.mxu0
    %761 = vmatprep.subr.bf16.mxu0 0
    %762 = vmatpush1.bf16.msra.mxu0 %v680
    %763 = vmatprep.subr.bf16.mxu0 0
    %764 = vmatpush1.bf16.msra.mxu0 %v681
    %765 = vmatprep.subr.bf16.mxu0 0
    %766 = vmatpush1.bf16.msra.mxu0 %v682
    %767 = vmatprep.subr.bf16.mxu0 0
    %768 = vmatpush1.bf16.msra.mxu0 %v683
    %769 = vmatprep.subr.bf16.mxu0 0
    %770 = vmatpush1.bf16.msra.mxu0 %v684
    %771 = vmatprep.subr.bf16.mxu0 0
    %772 = vmatpush1.bf16.msra.mxu0 %v685
    %773 = vmatprep.subr.bf16.mxu0 0
    %774 = vmatpush1.bf16.msra.mxu0 %v686
    %775 = vmatprep.subr.bf16.mxu0 0
    %776 = vmatpush1.bf16.msra.mxu0 %v687
    %777 = vmatprep.subr.bf16.mxu0 0
    %778 = vmatpush1.bf16.msra.mxu0 0
    %779 = vmatprep.subr.bf16.mxu0 0
    %780 = vmatpush1.bf16.msra.mxu0 0
    %781 = vmatprep.subr.bf16.mxu0 0
    %782 = vmatpush1.bf16.msra.mxu0 0
    %783 = vmatprep.subr.bf16.mxu0 0
    %784 = vmatpush1.bf16.msra.mxu0 0
    %785 = vmatprep.subr.bf16.mxu0 0
    %786 = vmatpush1.bf16.msra.mxu0 0
    %787 = vmatprep.subr.bf16.mxu0 0
    %788 = vmatpush1.bf16.msra.mxu0 0
    %789 = vmatprep.subr.bf16.mxu0 0
    %790 = vmatpush1.bf16.msra.mxu0 0
    %791 = vmatprep.subr.bf16.mxu0 0
    %792 = vmatpush1.bf16.msra.mxu0 0
    %793 = vmatprep.mubr.bf16.mxu0 0
    %794 = vmatmul.mubr.bf16.gmra.mrb[0].mxu0 %v558
    %v795 = vpop.f32.mrb[0].mxu0
    %v796 = vadd.f32 %v747, %v795
    %v797 = vpop.f32.mrb[0].mxu0
    %v798 = vpop.f32.mrb[0].mxu0
    %v799 = vadd.f32 %v750, %v798
    %v800 = vpop.f32.mrb[0].mxu0
    %801 = vmatprep.mubr.bf16.mxu0 0
    %802 = vmatmul.mubr.bf16.gmra.mrb[0].mxu0 %v561
    %v803 = vpop.f32.mrb[0].mxu0
    %v804 = vadd.f32 %v755, %v803
    %v805 = vpop.f32.mrb[0].mxu0
    %v806 = vpop.f32.mrb[0].mxu0
    %v807 = vadd.f32 %v758, %v806
    %v808 = vpop.f32.mrb[0].mxu0
    %809 = vdwg.mxu0
    %v810 = vadd.f32 %v796, %v118
    %v811 = vadd.f32 %v799, %v119
    %v812 = vadd.f32 %v804, %v120
    %v813 = vadd.f32 %v807, %v121
    %s814 = scalar_lea.vmem %s1, 192
    %v815 = vld [vmem:[%s814] sm:$0xf]
    %v816 = vld [vmem:[%s814 + $0x4] sm:$0xf]
    %v817 = vld [vmem:[%s814 + $0x8] sm:$0xf]
    %v818 = vld [vmem:[%s814 + $0xc] sm:$0xf]
    %v819 = vld [vmem:[%s814 + $0x10] sm:$0xf]
    %v820 = vld [vmem:[%s814 + $0x14] sm:$0xf]
    %v821 = vld [vmem:[%s814 + $0x18] sm:$0xf]
    %v822 = vld [vmem:[%s814 + $0x1c] sm:$0xf]
    %v823 = vld [vmem:[%s814 + $0x20] sm:$0xf]
    %v824 = vld [vmem:[%s814 + $0x24] sm:$0xf]
    %v825 = vld [vmem:[%s814 + $0x28] sm:$0xf]
    %v826 = vld [vmem:[%s814 + $0x2c] sm:$0xf]
    %v827 = vld [vmem:[%s814 + $0x30] sm:$0xf]
    %v828 = vld [vmem:[%s814 + $0x34] sm:$0xf]
    %v829 = vld [vmem:[%s814 + $0x38] sm:$0xf]
    %v830 = vld [vmem:[%s814 + $0x3c] sm:$0xf]
    %v831 = vld [vmem:[%s814 + $0x40] sm:$0xf]
    %v832 = vld [vmem:[%s814 + $0x44] sm:$0xf]
    %v833 = vld [vmem:[%s814 + $0x48] sm:$0xf]
    %v834 = vld [vmem:[%s814 + $0x4c] sm:$0xf]
    %v835 = vld [vmem:[%s814 + $0x50] sm:$0xf]
    %v836 = vld [vmem:[%s814 + $0x54] sm:$0xf]
    %v837 = vld [vmem:[%s814 + $0x58] sm:$0xf]
    %v838 = vld [vmem:[%s814 + $0x5c] sm:$0xf]
    %v839 = vld [vmem:[%s814 + $0x60] sm:$0xf]
    %v840 = vld [vmem:[%s814 + $0x64] sm:$0xf]
    %v841 = vld [vmem:[%s814 + $0x68] sm:$0xf]
    %v842 = vld [vmem:[%s814 + $0x6c] sm:$0xf]
    %v843 = vld [vmem:[%s814 + $0x70] sm:$0xf]
    %v844 = vld [vmem:[%s814 + $0x74] sm:$0xf]
    %v845 = vld [vmem:[%s814 + $0x78] sm:$0xf]
    %v846 = vld [vmem:[%s814 + $0x7c] sm:$0xf]
    %v847 = vld [vmem:[%s814 + $0x80] sm:$0xf]
    %v848 = vld [vmem:[%s814 + $0x84] sm:$0xf]
    %v849 = vld [vmem:[%s814 + $0x88] sm:$0xf]
    %v850 = vld [vmem:[%s814 + $0x8c] sm:$0xf]
    %v851 = vld [vmem:[%s814 + $0x90] sm:$0xf]
    %v852 = vld [vmem:[%s814 + $0x94] sm:$0xf]
    %v853 = vld [vmem:[%s814 + $0x98] sm:$0xf]
    %v854 = vld [vmem:[%s814 + $0x9c] sm:$0xf]
    %v855 = vld [vmem:[%s814 + $0xa0] sm:$0xf]
    %v856 = vld [vmem:[%s814 + $0xa4] sm:$0xf]
    %v857 = vld [vmem:[%s814 + $0xa8] sm:$0xf]
    %v858 = vld [vmem:[%s814 + $0xac] sm:$0xf]
    %v859 = vld [vmem:[%s814 + $0xb0] sm:$0xf]
    %v860 = vld [vmem:[%s814 + $0xb4] sm:$0xf]
    %v861 = vld [vmem:[%s814 + $0xb8] sm:$0xf]
    %v862 = vld [vmem:[%s814 + $0xbc] sm:$0xf]
    %s863 = scalar_lea.vmem %s2, 1
    %v864 = vld [vmem:[%s863] sm:$0x1]
    %v869 = vrot.slane %v810, 7
    %v870 = vrot.slane %v811, 7
    %v871 = vsel %vm175, %v869, %v870
    %v872 = vrot.slane %v812, 7
    %v873 = vsel %vm175, %v870, %v872
    %v874 = vrot.slane %v813, 7
    %v875 = vsel %vm175, %v872, %v874
    %v880 = vsel %vm175, 0.0, %v869
    %v881 = vmul.f32 %v880, %v102
    %v882 = vmul.f32 %v871, %v103
    %v883 = vmul.f32 %v873, %v104
    %v884 = vmul.f32 %v875, %v105
    %v885 = vrot.slane %v810, 1
    %v886 = vrot.slane %v811, 1
    %v887 = vsel %vm192, %v885, %v886
    %v888 = vrot.slane %v812, 1
    %v889 = vsel %vm192, %v886, %v888
    %v890 = vrot.slane %v813, 1
    %v891 = vsel %vm192, %v888, %v890
    %v896 = vsel %vm192, %v890, 0.0
    %v897 = vmul.f32 %v887, %v114
    %v898 = vmul.f32 %v889, %v115
    %v899 = vmul.f32 %v891, %v116
    %v900 = vmul.f32 %v896, %v117
    %v901 = vpack.c.bf16 %v882, %v881
    %v902 = vpack.c.bf16 %v811, %v810
    %v903 = vpack.c.bf16 %v898, %v897
    %v904 = vpack.c.bf16 %v884, %v883
    %v905 = vpack.c.bf16 %v813, %v812
    %v906 = vpack.c.bf16 %v900, %v899
    %v908 = vlaneseq
    %v909 = vshrl.u32 %v908, 7
    %v910 = vsub.s32 0, %v909
    %v911 = vrot.slane %v864, %v910
    %v961 = vunpack.c.l.b16 %v815
    %v962 = vunpack.c.l.b16 %v816
    %v963 = vunpack.c.l.b16 %v817
    %v964 = vunpack.c.l.b16 %v818
    %v965 = vunpack.c.l.b16 %v819
    %v966 = vunpack.c.l.b16 %v820
    %v967 = vunpack.c.l.b16 %v821
    %v968 = vunpack.c.l.b16 %v822
    %v969 = vunpack.c.l.b16 %v823
    %v970 = vunpack.c.l.b16 %v824
    %v971 = vunpack.c.l.b16 %v825
    %v972 = vunpack.c.l.b16 %v826
    %v973 = vunpack.c.l.b16 %v827
    %v974 = vunpack.c.l.b16 %v828
    %v975 = vunpack.c.l.b16 %v829
    %v976 = vunpack.c.l.b16 %v830
    %v977 = vunpack.c.l.b16 %v831
    %v978 = vunpack.c.l.b16 %v832
    %v979 = vunpack.c.l.b16 %v833
    %v980 = vunpack.c.l.b16 %v834
    %v981 = vunpack.c.l.b16 %v835
    %v982 = vunpack.c.l.b16 %v836
    %v983 = vunpack.c.l.b16 %v837
    %v984 = vunpack.c.l.b16 %v838
    %v985 = vunpack.c.l.b16 %v839
    %v986 = vunpack.c.l.b16 %v840
    %v987 = vunpack.c.l.b16 %v841
    %v988 = vunpack.c.l.b16 %v842
    %v989 = vunpack.c.l.b16 %v843
    %v990 = vunpack.c.l.b16 %v844
    %v991 = vunpack.c.l.b16 %v845
    %v992 = vunpack.c.l.b16 %v846
    %v993 = vunpack.c.l.b16 %v847
    %v994 = vunpack.c.l.b16 %v848
    %v995 = vunpack.c.l.b16 %v849
    %v996 = vunpack.c.l.b16 %v850
    %v997 = vunpack.c.l.b16 %v851
    %v998 = vunpack.c.l.b16 %v852
    %v999 = vunpack.c.l.b16 %v853
    %v1000 = vunpack.c.l.b16 %v854
    %v1001 = vunpack.c.l.b16 %v855
    %v1002 = vunpack.c.l.b16 %v856
    %v1003 = vunpack.c.l.b16 %v857
    %v1004 = vunpack.c.l.b16 %v858
    %v1005 = vunpack.c.l.b16 %v859
    %v1006 = vunpack.c.l.b16 %v860
    %v1007 = vunpack.c.l.b16 %v861
    %v1008 = vunpack.c.l.b16 %v862
    %v1009 = vpack.c.b16 %v962, %v961
    %v1010 = vpack.c.b16 %v964, %v963
    %v1011 = vpack.c.b16 %v966, %v965
    %v1012 = vpack.c.b16 %v968, %v967
    %v1013 = vpack.c.b16 %v970, %v969
    %v1014 = vpack.c.b16 %v972, %v971
    %v1015 = vpack.c.b16 %v974, %v973
    %v1016 = vpack.c.b16 %v976, %v975
    %v1017 = vpack.c.b16 %v978, %v977
    %v1018 = vpack.c.b16 %v980, %v979
    %v1019 = vpack.c.b16 %v982, %v981
    %v1020 = vpack.c.b16 %v984, %v983
    %v1021 = vpack.c.b16 %v986, %v985
    %v1022 = vpack.c.b16 %v988, %v987
    %v1023 = vpack.c.b16 %v990, %v989
    %v1024 = vpack.c.b16 %v992, %v991
    %v1025 = vpack.c.b16 %v994, %v993
    %v1026 = vpack.c.b16 %v996, %v995
    %v1027 = vpack.c.b16 %v998, %v997
    %v1028 = vpack.c.b16 %v1000, %v999
    %v1029 = vpack.c.b16 %v1002, %v1001
    %v1030 = vpack.c.b16 %v1004, %v1003
    %v1031 = vpack.c.b16 %v1006, %v1005
    %v1032 = vpack.c.b16 %v1008, %v1007
    %1057 = vmatprep.subr.bf16.mxu0 0
    %1058 = vmatpush1.bf16.msra.mxu0 %v1009
    %1059 = vmatprep.subr.bf16.mxu0 0
    %1060 = vmatpush1.bf16.msra.mxu0 %v1010
    %1061 = vmatprep.subr.bf16.mxu0 0
    %1062 = vmatpush1.bf16.msra.mxu0 %v1011
    %1063 = vmatprep.subr.bf16.mxu0 0
    %1064 = vmatpush1.bf16.msra.mxu0 %v1012
    %1065 = vmatprep.subr.bf16.mxu0 0
    %1066 = vmatpush1.bf16.msra.mxu0 %v1013
    %1067 = vmatprep.subr.bf16.mxu0 0
    %1068 = vmatpush1.bf16.msra.mxu0 %v1014
    %1069 = vmatprep.subr.bf16.mxu0 0
    %1070 = vmatpush1.bf16.msra.mxu0 %v1015
    %1071 = vmatprep.subr.bf16.mxu0 0
    %1072 = vmatpush1.bf16.msra.mxu0 %v1016
    %1073 = vmatprep.subr.bf16.mxu0 0
    %1074 = vmatpush1.bf16.msra.mxu0 %v1017
    %1075 = vmatprep.subr.bf16.mxu0 0
    %1076 = vmatpush1.bf16.msra.mxu0 %v1018
    %1077 = vmatprep.subr.bf16.mxu0 0
    %1078 = vmatpush1.bf16.msra.mxu0 %v1019
    %1079 = vmatprep.subr.bf16.mxu0 0
    %1080 = vmatpush1.bf16.msra.mxu0 %v1020
    %1081 = vmatprep.subr.bf16.mxu0 0
    %1082 = vmatpush1.bf16.msra.mxu0 %v1021
    %1083 = vmatprep.subr.bf16.mxu0 0
    %1084 = vmatpush1.bf16.msra.mxu0 %v1022
    %1085 = vmatprep.subr.bf16.mxu0 0
    %1086 = vmatpush1.bf16.msra.mxu0 %v1023
    %1087 = vmatprep.subr.bf16.mxu0 0
    %1088 = vmatpush1.bf16.msra.mxu0 %v1024
    %1089 = vmatprep.mubr.bf16.mxu0 %v902
    %1090 = vmatmul.mubr.bf16.gmra.mrb[0].mxu0 %v901
    %v1091 = vpop.f32.mrb[0].mxu0
    %v1092 = vadd.f32 %v911, %v1091
    %v1093 = vpop.f32.mrb[0].mxu0
    %v1094 = vpop.f32.mrb[0].mxu0
    %v1095 = vadd.f32 %v911, %v1094
    %v1096 = vpop.f32.mrb[0].mxu0
    %1097 = vmatprep.mubr.bf16.mxu0 %v905
    %1098 = vmatmul.mubr.bf16.gmra.mrb[0].mxu0 %v904
    %v1099 = vpop.f32.mrb[0].mxu0
    %v1100 = vadd.f32 %v911, %v1099
    %v1101 = vpop.f32.mrb[0].mxu0
    %v1102 = vpop.f32.mrb[0].mxu0
    %v1103 = vadd.f32 %v911, %v1102
    %v1104 = vpop.f32.mrb[0].mxu0
    %1105 = vdwg.mxu0
    %1106 = vmatprep.subr.bf16.mxu0 0
    %1107 = vmatpush1.bf16.msra.mxu0 %v1025
    %1108 = vmatprep.subr.bf16.mxu0 0
    %1109 = vmatpush1.bf16.msra.mxu0 %v1026
    %1110 = vmatprep.subr.bf16.mxu0 0
    %1111 = vmatpush1.bf16.msra.mxu0 %v1027
    %1112 = vmatprep.subr.bf16.mxu0 0
    %1113 = vmatpush1.bf16.msra.mxu0 %v1028
    %1114 = vmatprep.subr.bf16.mxu0 0
    %1115 = vmatpush1.bf16.msra.mxu0 %v1029
    %1116 = vmatprep.subr.bf16.mxu0 0
    %1117 = vmatpush1.bf16.msra.mxu0 %v1030
    %1118 = vmatprep.subr.bf16.mxu0 0
    %1119 = vmatpush1.bf16.msra.mxu0 %v1031
    %1120 = vmatprep.subr.bf16.mxu0 0
    %1121 = vmatpush1.bf16.msra.mxu0 %v1032
    %1122 = vmatprep.subr.bf16.mxu0 0
    %1123 = vmatpush1.bf16.msra.mxu0 0
    %1124 = vmatprep.subr.bf16.mxu0 0
    %1125 = vmatpush1.bf16.msra.mxu0 0
    %1126 = vmatprep.subr.bf16.mxu0 0
    %1127 = vmatpush1.bf16.msra.mxu0 0
    %1128 = vmatprep.subr.bf16.mxu0 0
    %1129 = vmatpush1.bf16.msra.mxu0 0
    %1130 = vmatprep.subr.bf16.mxu0 0
    %1131 = vmatpush1.bf16.msra.mxu0 0
    %1132 = vmatprep.subr.bf16.mxu0 0
    %1133 = vmatpush1.bf16.msra.mxu0 0
    %1134 = vmatprep.subr.bf16.mxu0 0
    %1135 = vmatpush1.bf16.msra.mxu0 0
    %1136 = vmatprep.subr.bf16.mxu0 0
    %1137 = vmatpush1.bf16.msra.mxu0 0
    %1138 = vmatprep.mubr.bf16.mxu0 0
    %1139 = vmatmul.mubr.bf16.gmra.mrb[0].mxu0 %v903
    %v1140 = vpop.f32.mrb[0].mxu0
    %v1141 = vadd.f32 %v1092, %v1140
    %v1142 = vpop.f32.mrb[0].mxu0
    %v1143 = vpop.f32.mrb[0].mxu0
    %v1144 = vadd.f32 %v1095, %v1143
    %v1145 = vpop.f32.mrb[0].mxu0
    %1146 = vmatprep.mubr.bf16.mxu0 0
    %1147 = vmatmul.mubr.bf16.gmra.mrb[0].mxu0 %v906
    %v1148 = vpop.f32.mrb[0].mxu0
    %v1149 = vadd.f32 %v1100, %v1148
    %v1150 = vpop.f32.mrb[0].mxu0
    %v1151 = vpop.f32.mrb[0].mxu0
    %v1152 = vadd.f32 %v1103, %v1151
    %v1153 = vpop.f32.mrb[0].mxu0
    %1154 = vdwg.mxu0
    %v1155 = vmul.f32 %v1141, 0.2
    %v1156 = vmul.f32 %v1144, 0.2
    %v1157 = vmul.f32 %v1149, 0.2
    %v1158 = vmul.f32 %v1152, 0.2
    %v1159 = vmax.f32 %v1141, %v1155
    %v1160 = vmax.f32 %v1144, %v1156
    %v1161 = vmax.f32 %v1149, %v1157
    %v1162 = vmax.f32 %v1152, %v1158
    %s1163 = scalar_lea.vmem %s3, 192
    %v1164 = vld [vmem:[%s1163] sm:$0xf]
    %v1165 = vld [vmem:[%s1163 + $0x4] sm:$0xf]
    %v1166 = vld [vmem:[%s1163 + $0x8] sm:$0xf]
    %v1167 = vld [vmem:[%s1163 + $0xc] sm:$0xf]
    %v1168 = vld [vmem:[%s1163 + $0x10] sm:$0xf]
    %v1169 = vld [vmem:[%s1163 + $0x14] sm:$0xf]
    %v1170 = vld [vmem:[%s1163 + $0x18] sm:$0xf]
    %v1171 = vld [vmem:[%s1163 + $0x1c] sm:$0xf]
    %v1172 = vld [vmem:[%s1163 + $0x20] sm:$0xf]
    %v1173 = vld [vmem:[%s1163 + $0x24] sm:$0xf]
    %v1174 = vld [vmem:[%s1163 + $0x28] sm:$0xf]
    %v1175 = vld [vmem:[%s1163 + $0x2c] sm:$0xf]
    %v1176 = vld [vmem:[%s1163 + $0x30] sm:$0xf]
    %v1177 = vld [vmem:[%s1163 + $0x34] sm:$0xf]
    %v1178 = vld [vmem:[%s1163 + $0x38] sm:$0xf]
    %v1179 = vld [vmem:[%s1163 + $0x3c] sm:$0xf]
    %v1180 = vld [vmem:[%s1163 + $0x40] sm:$0xf]
    %v1181 = vld [vmem:[%s1163 + $0x44] sm:$0xf]
    %v1182 = vld [vmem:[%s1163 + $0x48] sm:$0xf]
    %v1183 = vld [vmem:[%s1163 + $0x4c] sm:$0xf]
    %v1184 = vld [vmem:[%s1163 + $0x50] sm:$0xf]
    %v1185 = vld [vmem:[%s1163 + $0x54] sm:$0xf]
    %v1186 = vld [vmem:[%s1163 + $0x58] sm:$0xf]
    %v1187 = vld [vmem:[%s1163 + $0x5c] sm:$0xf]
    %v1188 = vld [vmem:[%s1163 + $0x60] sm:$0xf]
    %v1189 = vld [vmem:[%s1163 + $0x64] sm:$0xf]
    %v1190 = vld [vmem:[%s1163 + $0x68] sm:$0xf]
    %v1191 = vld [vmem:[%s1163 + $0x6c] sm:$0xf]
    %v1192 = vld [vmem:[%s1163 + $0x70] sm:$0xf]
    %v1193 = vld [vmem:[%s1163 + $0x74] sm:$0xf]
    %v1194 = vld [vmem:[%s1163 + $0x78] sm:$0xf]
    %v1195 = vld [vmem:[%s1163 + $0x7c] sm:$0xf]
    %v1196 = vld [vmem:[%s1163 + $0x80] sm:$0xf]
    %v1197 = vld [vmem:[%s1163 + $0x84] sm:$0xf]
    %v1198 = vld [vmem:[%s1163 + $0x88] sm:$0xf]
    %v1199 = vld [vmem:[%s1163 + $0x8c] sm:$0xf]
    %v1200 = vld [vmem:[%s1163 + $0x90] sm:$0xf]
    %v1201 = vld [vmem:[%s1163 + $0x94] sm:$0xf]
    %v1202 = vld [vmem:[%s1163 + $0x98] sm:$0xf]
    %v1203 = vld [vmem:[%s1163 + $0x9c] sm:$0xf]
    %v1204 = vld [vmem:[%s1163 + $0xa0] sm:$0xf]
    %v1205 = vld [vmem:[%s1163 + $0xa4] sm:$0xf]
    %v1206 = vld [vmem:[%s1163 + $0xa8] sm:$0xf]
    %v1207 = vld [vmem:[%s1163 + $0xac] sm:$0xf]
    %v1208 = vld [vmem:[%s1163 + $0xb0] sm:$0xf]
    %v1209 = vld [vmem:[%s1163 + $0xb4] sm:$0xf]
    %v1210 = vld [vmem:[%s1163 + $0xb8] sm:$0xf]
    %v1211 = vld [vmem:[%s1163 + $0xbc] sm:$0xf]
    %s1212 = scalar_lea.vmem %s4, 1
    %v1213 = vld [vmem:[%s1212] sm:$0x1]
    %v1218 = vrot.slane %v1159, 7
    %v1219 = vrot.slane %v1160, 7
    %v1220 = vsel %vm175, %v1218, %v1219
    %v1221 = vrot.slane %v1161, 7
    %v1222 = vsel %vm175, %v1219, %v1221
    %v1223 = vrot.slane %v1162, 7
    %v1224 = vsel %vm175, %v1221, %v1223
    %v1229 = vsel %vm175, 0.0, %v1218
    %v1230 = vmul.f32 %v1229, %v102
    %v1231 = vmul.f32 %v1220, %v103
    %v1232 = vmul.f32 %v1222, %v104
    %v1233 = vmul.f32 %v1224, %v105
    %v1234 = vrot.slane %v1159, 1
    %v1235 = vrot.slane %v1160, 1
    %v1236 = vsel %vm192, %v1234, %v1235
    %v1237 = vrot.slane %v1161, 1
    %v1238 = vsel %vm192, %v1235, %v1237
    %v1239 = vrot.slane %v1162, 1
    %v1240 = vsel %vm192, %v1237, %v1239
    %v1245 = vsel %vm192, %v1239, 0.0
    %v1246 = vmul.f32 %v1236, %v114
    %v1247 = vmul.f32 %v1238, %v115
    %v1248 = vmul.f32 %v1240, %v116
    %v1249 = vmul.f32 %v1245, %v117
    %v1250 = vpack.c.bf16 %v1231, %v1230
    %v1251 = vpack.c.bf16 %v1160, %v1159
    %v1252 = vpack.c.bf16 %v1247, %v1246
    %v1253 = vpack.c.bf16 %v1233, %v1232
    %v1254 = vpack.c.bf16 %v1162, %v1161
    %v1255 = vpack.c.bf16 %v1249, %v1248
    %v1257 = vlaneseq
    %v1258 = vshrl.u32 %v1257, 7
    %v1259 = vsub.s32 0, %v1258
    %v1260 = vrot.slane %v1213, %v1259
    %v1310 = vunpack.c.l.b16 %v1164
    %v1311 = vunpack.c.l.b16 %v1165
    %v1312 = vunpack.c.l.b16 %v1166
    %v1313 = vunpack.c.l.b16 %v1167
    %v1314 = vunpack.c.l.b16 %v1168
    %v1315 = vunpack.c.l.b16 %v1169
    %v1316 = vunpack.c.l.b16 %v1170
    %v1317 = vunpack.c.l.b16 %v1171
    %v1318 = vunpack.c.l.b16 %v1172
    %v1319 = vunpack.c.l.b16 %v1173
    %v1320 = vunpack.c.l.b16 %v1174
    %v1321 = vunpack.c.l.b16 %v1175
    %v1322 = vunpack.c.l.b16 %v1176
    %v1323 = vunpack.c.l.b16 %v1177
    %v1324 = vunpack.c.l.b16 %v1178
    %v1325 = vunpack.c.l.b16 %v1179
    %v1326 = vunpack.c.l.b16 %v1180
    %v1327 = vunpack.c.l.b16 %v1181
    %v1328 = vunpack.c.l.b16 %v1182
    %v1329 = vunpack.c.l.b16 %v1183
    %v1330 = vunpack.c.l.b16 %v1184
    %v1331 = vunpack.c.l.b16 %v1185
    %v1332 = vunpack.c.l.b16 %v1186
    %v1333 = vunpack.c.l.b16 %v1187
    %v1334 = vunpack.c.l.b16 %v1188
    %v1335 = vunpack.c.l.b16 %v1189
    %v1336 = vunpack.c.l.b16 %v1190
    %v1337 = vunpack.c.l.b16 %v1191
    %v1338 = vunpack.c.l.b16 %v1192
    %v1339 = vunpack.c.l.b16 %v1193
    %v1340 = vunpack.c.l.b16 %v1194
    %v1341 = vunpack.c.l.b16 %v1195
    %v1342 = vunpack.c.l.b16 %v1196
    %v1343 = vunpack.c.l.b16 %v1197
    %v1344 = vunpack.c.l.b16 %v1198
    %v1345 = vunpack.c.l.b16 %v1199
    %v1346 = vunpack.c.l.b16 %v1200
    %v1347 = vunpack.c.l.b16 %v1201
    %v1348 = vunpack.c.l.b16 %v1202
    %v1349 = vunpack.c.l.b16 %v1203
    %v1350 = vunpack.c.l.b16 %v1204
    %v1351 = vunpack.c.l.b16 %v1205
    %v1352 = vunpack.c.l.b16 %v1206
    %v1353 = vunpack.c.l.b16 %v1207
    %v1354 = vunpack.c.l.b16 %v1208
    %v1355 = vunpack.c.l.b16 %v1209
    %v1356 = vunpack.c.l.b16 %v1210
    %v1357 = vunpack.c.l.b16 %v1211
    %v1358 = vpack.c.b16 %v1311, %v1310
    %v1359 = vpack.c.b16 %v1313, %v1312
    %v1360 = vpack.c.b16 %v1315, %v1314
    %v1361 = vpack.c.b16 %v1317, %v1316
    %v1362 = vpack.c.b16 %v1319, %v1318
    %v1363 = vpack.c.b16 %v1321, %v1320
    %v1364 = vpack.c.b16 %v1323, %v1322
    %v1365 = vpack.c.b16 %v1325, %v1324
    %v1366 = vpack.c.b16 %v1327, %v1326
    %v1367 = vpack.c.b16 %v1329, %v1328
    %v1368 = vpack.c.b16 %v1331, %v1330
    %v1369 = vpack.c.b16 %v1333, %v1332
    %v1370 = vpack.c.b16 %v1335, %v1334
    %v1371 = vpack.c.b16 %v1337, %v1336
    %v1372 = vpack.c.b16 %v1339, %v1338
    %v1373 = vpack.c.b16 %v1341, %v1340
    %v1374 = vpack.c.b16 %v1343, %v1342
    %v1375 = vpack.c.b16 %v1345, %v1344
    %v1376 = vpack.c.b16 %v1347, %v1346
    %v1377 = vpack.c.b16 %v1349, %v1348
    %v1378 = vpack.c.b16 %v1351, %v1350
    %v1379 = vpack.c.b16 %v1353, %v1352
    %v1380 = vpack.c.b16 %v1355, %v1354
    %v1381 = vpack.c.b16 %v1357, %v1356
    %1406 = vmatprep.subr.bf16.mxu0 0
    %1407 = vmatpush1.bf16.msra.mxu0 %v1358
    %1408 = vmatprep.subr.bf16.mxu0 0
    %1409 = vmatpush1.bf16.msra.mxu0 %v1359
    %1410 = vmatprep.subr.bf16.mxu0 0
    %1411 = vmatpush1.bf16.msra.mxu0 %v1360
    %1412 = vmatprep.subr.bf16.mxu0 0
    %1413 = vmatpush1.bf16.msra.mxu0 %v1361
    %1414 = vmatprep.subr.bf16.mxu0 0
    %1415 = vmatpush1.bf16.msra.mxu0 %v1362
    %1416 = vmatprep.subr.bf16.mxu0 0
    %1417 = vmatpush1.bf16.msra.mxu0 %v1363
    %1418 = vmatprep.subr.bf16.mxu0 0
    %1419 = vmatpush1.bf16.msra.mxu0 %v1364
    %1420 = vmatprep.subr.bf16.mxu0 0
    %1421 = vmatpush1.bf16.msra.mxu0 %v1365
    %1422 = vmatprep.subr.bf16.mxu0 0
    %1423 = vmatpush1.bf16.msra.mxu0 %v1366
    %1424 = vmatprep.subr.bf16.mxu0 0
    %1425 = vmatpush1.bf16.msra.mxu0 %v1367
    %1426 = vmatprep.subr.bf16.mxu0 0
    %1427 = vmatpush1.bf16.msra.mxu0 %v1368
    %1428 = vmatprep.subr.bf16.mxu0 0
    %1429 = vmatpush1.bf16.msra.mxu0 %v1369
    %1430 = vmatprep.subr.bf16.mxu0 0
    %1431 = vmatpush1.bf16.msra.mxu0 %v1370
    %1432 = vmatprep.subr.bf16.mxu0 0
    %1433 = vmatpush1.bf16.msra.mxu0 %v1371
    %1434 = vmatprep.subr.bf16.mxu0 0
    %1435 = vmatpush1.bf16.msra.mxu0 %v1372
    %1436 = vmatprep.subr.bf16.mxu0 0
    %1437 = vmatpush1.bf16.msra.mxu0 %v1373
    %1438 = vmatprep.mubr.bf16.mxu0 %v1251
    %1439 = vmatmul.mubr.bf16.gmra.mrb[0].mxu0 %v1250
    %v1440 = vpop.f32.mrb[0].mxu0
    %v1441 = vadd.f32 %v1260, %v1440
    %v1442 = vpop.f32.mrb[0].mxu0
    %v1443 = vpop.f32.mrb[0].mxu0
    %v1444 = vadd.f32 %v1260, %v1443
    %v1445 = vpop.f32.mrb[0].mxu0
    %1446 = vmatprep.mubr.bf16.mxu0 %v1254
    %1447 = vmatmul.mubr.bf16.gmra.mrb[0].mxu0 %v1253
    %v1448 = vpop.f32.mrb[0].mxu0
    %v1449 = vadd.f32 %v1260, %v1448
    %v1450 = vpop.f32.mrb[0].mxu0
    %v1451 = vpop.f32.mrb[0].mxu0
    %v1452 = vadd.f32 %v1260, %v1451
    %v1453 = vpop.f32.mrb[0].mxu0
    %1454 = vdwg.mxu0
    %1455 = vmatprep.subr.bf16.mxu0 0
    %1456 = vmatpush1.bf16.msra.mxu0 %v1374
    %1457 = vmatprep.subr.bf16.mxu0 0
    %1458 = vmatpush1.bf16.msra.mxu0 %v1375
    %1459 = vmatprep.subr.bf16.mxu0 0
    %1460 = vmatpush1.bf16.msra.mxu0 %v1376
    %1461 = vmatprep.subr.bf16.mxu0 0
    %1462 = vmatpush1.bf16.msra.mxu0 %v1377
    %1463 = vmatprep.subr.bf16.mxu0 0
    %1464 = vmatpush1.bf16.msra.mxu0 %v1378
    %1465 = vmatprep.subr.bf16.mxu0 0
    %1466 = vmatpush1.bf16.msra.mxu0 %v1379
    %1467 = vmatprep.subr.bf16.mxu0 0
    %1468 = vmatpush1.bf16.msra.mxu0 %v1380
    %1469 = vmatprep.subr.bf16.mxu0 0
    %1470 = vmatpush1.bf16.msra.mxu0 %v1381
    %1471 = vmatprep.subr.bf16.mxu0 0
    %1472 = vmatpush1.bf16.msra.mxu0 0
    %1473 = vmatprep.subr.bf16.mxu0 0
    %1474 = vmatpush1.bf16.msra.mxu0 0
    %1475 = vmatprep.subr.bf16.mxu0 0
    %1476 = vmatpush1.bf16.msra.mxu0 0
    %1477 = vmatprep.subr.bf16.mxu0 0
    %1478 = vmatpush1.bf16.msra.mxu0 0
    %1479 = vmatprep.subr.bf16.mxu0 0
    %1480 = vmatpush1.bf16.msra.mxu0 0
    %1481 = vmatprep.subr.bf16.mxu0 0
    %1482 = vmatpush1.bf16.msra.mxu0 0
    %1483 = vmatprep.subr.bf16.mxu0 0
    %1484 = vmatpush1.bf16.msra.mxu0 0
    %1485 = vmatprep.subr.bf16.mxu0 0
    %1486 = vmatpush1.bf16.msra.mxu0 0
    %1487 = vmatprep.mubr.bf16.mxu0 0
    %1488 = vmatmul.mubr.bf16.gmra.mrb[0].mxu0 %v1252
    %v1489 = vpop.f32.mrb[0].mxu0
    %v1490 = vadd.f32 %v1441, %v1489
    %v1491 = vpop.f32.mrb[0].mxu0
    %v1492 = vpop.f32.mrb[0].mxu0
    %v1493 = vadd.f32 %v1444, %v1492
    %v1494 = vpop.f32.mrb[0].mxu0
    %1495 = vmatprep.mubr.bf16.mxu0 0
    %1496 = vmatmul.mubr.bf16.gmra.mrb[0].mxu0 %v1255
    %v1497 = vpop.f32.mrb[0].mxu0
    %v1498 = vadd.f32 %v1449, %v1497
    %v1499 = vpop.f32.mrb[0].mxu0
    %v1500 = vpop.f32.mrb[0].mxu0
    %v1501 = vadd.f32 %v1452, %v1500
    %v1502 = vpop.f32.mrb[0].mxu0
    %1503 = vdwg.mxu0
    %v1504 = vadd.f32 %v1490, %v810
    %v1505 = vadd.f32 %v1493, %v811
    %v1506 = vadd.f32 %v1498, %v812
    %v1507 = vadd.f32 %v1501, %v813
    %v1508 = vld [vmem:[#allocation2] sm:$0xf]
    %v1509 = vld [vmem:[#allocation2 + $0x4] sm:$0xf]
    %v1510 = vld [vmem:[#allocation2 + $0x8] sm:$0xf]
    %v1511 = vld [vmem:[#allocation2 + $0xc] sm:$0xf]
    %v1512 = vld [vmem:[#allocation2 + $0x10] sm:$0xf]
    %v1513 = vld [vmem:[#allocation2 + $0x14] sm:$0xf]
    %v1514 = vld [vmem:[#allocation2 + $0x18] sm:$0xf]
    %v1515 = vld [vmem:[#allocation2 + $0x1c] sm:$0xf]
    %v1516 = vld [vmem:[#allocation2 + $0x20] sm:$0xf]
    %v1517 = vld [vmem:[#allocation2 + $0x24] sm:$0xf]
    %v1518 = vld [vmem:[#allocation2 + $0x28] sm:$0xf]
    %v1519 = vld [vmem:[#allocation2 + $0x2c] sm:$0xf]
    %v1520 = vld [vmem:[#allocation2 + $0x30] sm:$0xf]
    %v1521 = vld [vmem:[#allocation2 + $0x34] sm:$0xf]
    %v1522 = vld [vmem:[#allocation2 + $0x38] sm:$0xf]
    %v1523 = vld [vmem:[#allocation2 + $0x3c] sm:$0xf]
    %v1524 = vld [vmem:[#allocation2 + $0x40] sm:$0xf]
    %v1525 = vld [vmem:[#allocation2 + $0x44] sm:$0xf]
    %v1526 = vld [vmem:[#allocation2 + $0x48] sm:$0xf]
    %v1527 = vld [vmem:[#allocation2 + $0x4c] sm:$0xf]
    %v1528 = vld [vmem:[#allocation2 + $0x50] sm:$0xf]
    %v1529 = vld [vmem:[#allocation2 + $0x54] sm:$0xf]
    %v1530 = vld [vmem:[#allocation2 + $0x58] sm:$0xf]
    %v1531 = vld [vmem:[#allocation2 + $0x5c] sm:$0xf]
    %v1532 = vld [vmem:[#allocation2 + $0x60] sm:$0xf]
    %v1533 = vld [vmem:[#allocation2 + $0x64] sm:$0xf]
    %v1534 = vld [vmem:[#allocation2 + $0x68] sm:$0xf]
    %v1535 = vld [vmem:[#allocation2 + $0x6c] sm:$0xf]
    %v1536 = vld [vmem:[#allocation2 + $0x70] sm:$0xf]
    %v1537 = vld [vmem:[#allocation2 + $0x74] sm:$0xf]
    %v1538 = vld [vmem:[#allocation2 + $0x78] sm:$0xf]
    %v1539 = vld [vmem:[#allocation2 + $0x7c] sm:$0xf]
    %v1540 = vld [vmem:[#allocation2 + $0x80] sm:$0xf]
    %v1541 = vld [vmem:[#allocation2 + $0x84] sm:$0xf]
    %v1542 = vld [vmem:[#allocation2 + $0x88] sm:$0xf]
    %v1543 = vld [vmem:[#allocation2 + $0x8c] sm:$0xf]
    %v1544 = vld [vmem:[#allocation2 + $0x90] sm:$0xf]
    %v1545 = vld [vmem:[#allocation2 + $0x94] sm:$0xf]
    %v1546 = vld [vmem:[#allocation2 + $0x98] sm:$0xf]
    %v1547 = vld [vmem:[#allocation2 + $0x9c] sm:$0xf]
    %v1548 = vld [vmem:[#allocation2 + $0xa0] sm:$0xf]
    %v1549 = vld [vmem:[#allocation2 + $0xa4] sm:$0xf]
    %v1550 = vld [vmem:[#allocation2 + $0xa8] sm:$0xf]
    %v1551 = vld [vmem:[#allocation2 + $0xac] sm:$0xf]
    %v1552 = vld [vmem:[#allocation2 + $0xb0] sm:$0xf]
    %v1553 = vld [vmem:[#allocation2 + $0xb4] sm:$0xf]
    %v1554 = vld [vmem:[#allocation2 + $0xb8] sm:$0xf]
    %v1555 = vld [vmem:[#allocation2 + $0xbc] sm:$0xf]
    %v1556 = vld [vmem:[%s6] sm:$0x1]
    %v1561 = vrot.slane %v1504, 7
    %v1562 = vrot.slane %v1505, 7
    %v1563 = vsel %vm175, %v1561, %v1562
    %v1564 = vrot.slane %v1506, 7
    %v1565 = vsel %vm175, %v1562, %v1564
    %v1566 = vrot.slane %v1507, 7
    %v1567 = vsel %vm175, %v1564, %v1566
    %v1572 = vsel %vm175, 0.0, %v1561
    %v1573 = vmul.f32 %v1572, %v102
    %v1574 = vmul.f32 %v1563, %v103
    %v1575 = vmul.f32 %v1565, %v104
    %v1576 = vmul.f32 %v1567, %v105
    %v1577 = vrot.slane %v1504, 1
    %v1578 = vrot.slane %v1505, 1
    %v1579 = vsel %vm192, %v1577, %v1578
    %v1580 = vrot.slane %v1506, 1
    %v1581 = vsel %vm192, %v1578, %v1580
    %v1582 = vrot.slane %v1507, 1
    %v1583 = vsel %vm192, %v1580, %v1582
    %v1588 = vsel %vm192, %v1582, 0.0
    %v1589 = vmul.f32 %v1579, %v114
    %v1590 = vmul.f32 %v1581, %v115
    %v1591 = vmul.f32 %v1583, %v116
    %v1592 = vmul.f32 %v1588, %v117
    %v1593 = vpack.c.bf16 %v1574, %v1573
    %v1594 = vpack.c.bf16 %v1505, %v1504
    %v1595 = vpack.c.bf16 %v1590, %v1589
    %v1596 = vpack.c.bf16 %v1576, %v1575
    %v1597 = vpack.c.bf16 %v1507, %v1506
    %v1598 = vpack.c.bf16 %v1592, %v1591
    %v1600 = vlaneseq
    %v1601 = vshrl.u32 %v1600, 7
    %v1602 = vsub.s32 0, %v1601
    %v1603 = vrot.slane %v1556, %v1602
    %v1653 = vunpack.c.l.b16 %v1508
    %v1654 = vunpack.c.l.b16 %v1509
    %v1655 = vunpack.c.l.b16 %v1510
    %v1656 = vunpack.c.l.b16 %v1511
    %v1657 = vunpack.c.l.b16 %v1512
    %v1658 = vunpack.c.l.b16 %v1513
    %v1659 = vunpack.c.l.b16 %v1514
    %v1660 = vunpack.c.l.b16 %v1515
    %v1661 = vunpack.c.l.b16 %v1516
    %v1662 = vunpack.c.l.b16 %v1517
    %v1663 = vunpack.c.l.b16 %v1518
    %v1664 = vunpack.c.l.b16 %v1519
    %v1665 = vunpack.c.l.b16 %v1520
    %v1666 = vunpack.c.l.b16 %v1521
    %v1667 = vunpack.c.l.b16 %v1522
    %v1668 = vunpack.c.l.b16 %v1523
    %v1669 = vunpack.c.l.b16 %v1524
    %v1670 = vunpack.c.l.b16 %v1525
    %v1671 = vunpack.c.l.b16 %v1526
    %v1672 = vunpack.c.l.b16 %v1527
    %v1673 = vunpack.c.l.b16 %v1528
    %v1674 = vunpack.c.l.b16 %v1529
    %v1675 = vunpack.c.l.b16 %v1530
    %v1676 = vunpack.c.l.b16 %v1531
    %v1677 = vunpack.c.l.b16 %v1532
    %v1678 = vunpack.c.l.b16 %v1533
    %v1679 = vunpack.c.l.b16 %v1534
    %v1680 = vunpack.c.l.b16 %v1535
    %v1681 = vunpack.c.l.b16 %v1536
    %v1682 = vunpack.c.l.b16 %v1537
    %v1683 = vunpack.c.l.b16 %v1538
    %v1684 = vunpack.c.l.b16 %v1539
    %v1685 = vunpack.c.l.b16 %v1540
    %v1686 = vunpack.c.l.b16 %v1541
    %v1687 = vunpack.c.l.b16 %v1542
    %v1688 = vunpack.c.l.b16 %v1543
    %v1689 = vunpack.c.l.b16 %v1544
    %v1690 = vunpack.c.l.b16 %v1545
    %v1691 = vunpack.c.l.b16 %v1546
    %v1692 = vunpack.c.l.b16 %v1547
    %v1693 = vunpack.c.l.b16 %v1548
    %v1694 = vunpack.c.l.b16 %v1549
    %v1695 = vunpack.c.l.b16 %v1550
    %v1696 = vunpack.c.l.b16 %v1551
    %v1697 = vunpack.c.l.b16 %v1552
    %v1698 = vunpack.c.l.b16 %v1553
    %v1699 = vunpack.c.l.b16 %v1554
    %v1700 = vunpack.c.l.b16 %v1555
    %v1701 = vpack.c.b16 %v1654, %v1653
    %v1702 = vpack.c.b16 %v1656, %v1655
    %v1703 = vpack.c.b16 %v1658, %v1657
    %v1704 = vpack.c.b16 %v1660, %v1659
    %v1705 = vpack.c.b16 %v1662, %v1661
    %v1706 = vpack.c.b16 %v1664, %v1663
    %v1707 = vpack.c.b16 %v1666, %v1665
    %v1708 = vpack.c.b16 %v1668, %v1667
    %v1709 = vpack.c.b16 %v1670, %v1669
    %v1710 = vpack.c.b16 %v1672, %v1671
    %v1711 = vpack.c.b16 %v1674, %v1673
    %v1712 = vpack.c.b16 %v1676, %v1675
    %v1713 = vpack.c.b16 %v1678, %v1677
    %v1714 = vpack.c.b16 %v1680, %v1679
    %v1715 = vpack.c.b16 %v1682, %v1681
    %v1716 = vpack.c.b16 %v1684, %v1683
    %v1717 = vpack.c.b16 %v1686, %v1685
    %v1718 = vpack.c.b16 %v1688, %v1687
    %v1719 = vpack.c.b16 %v1690, %v1689
    %v1720 = vpack.c.b16 %v1692, %v1691
    %v1721 = vpack.c.b16 %v1694, %v1693
    %v1722 = vpack.c.b16 %v1696, %v1695
    %v1723 = vpack.c.b16 %v1698, %v1697
    %v1724 = vpack.c.b16 %v1700, %v1699
    %1749 = vmatprep.subr.bf16.mxu0 0
    %1750 = vmatpush1.bf16.msra.mxu0 %v1701
    %1751 = vmatprep.subr.bf16.mxu0 0
    %1752 = vmatpush1.bf16.msra.mxu0 %v1702
    %1753 = vmatprep.subr.bf16.mxu0 0
    %1754 = vmatpush1.bf16.msra.mxu0 %v1703
    %1755 = vmatprep.subr.bf16.mxu0 0
    %1756 = vmatpush1.bf16.msra.mxu0 %v1704
    %1757 = vmatprep.subr.bf16.mxu0 0
    %1758 = vmatpush1.bf16.msra.mxu0 %v1705
    %1759 = vmatprep.subr.bf16.mxu0 0
    %1760 = vmatpush1.bf16.msra.mxu0 %v1706
    %1761 = vmatprep.subr.bf16.mxu0 0
    %1762 = vmatpush1.bf16.msra.mxu0 %v1707
    %1763 = vmatprep.subr.bf16.mxu0 0
    %1764 = vmatpush1.bf16.msra.mxu0 %v1708
    %1765 = vmatprep.subr.bf16.mxu0 0
    %1766 = vmatpush1.bf16.msra.mxu0 %v1709
    %1767 = vmatprep.subr.bf16.mxu0 0
    %1768 = vmatpush1.bf16.msra.mxu0 %v1710
    %1769 = vmatprep.subr.bf16.mxu0 0
    %1770 = vmatpush1.bf16.msra.mxu0 %v1711
    %1771 = vmatprep.subr.bf16.mxu0 0
    %1772 = vmatpush1.bf16.msra.mxu0 %v1712
    %1773 = vmatprep.subr.bf16.mxu0 0
    %1774 = vmatpush1.bf16.msra.mxu0 %v1713
    %1775 = vmatprep.subr.bf16.mxu0 0
    %1776 = vmatpush1.bf16.msra.mxu0 %v1714
    %1777 = vmatprep.subr.bf16.mxu0 0
    %1778 = vmatpush1.bf16.msra.mxu0 %v1715
    %1779 = vmatprep.subr.bf16.mxu0 0
    %1780 = vmatpush1.bf16.msra.mxu0 %v1716
    %1781 = vmatprep.mubr.bf16.mxu0 %v1594
    %1782 = vmatmul.mubr.bf16.gmra.mrb[0].mxu0 %v1593
    %v1783 = vpop.f32.mrb[0].mxu0
    %v1784 = vadd.f32 %v1603, %v1783
    %v1785 = vpop.f32.mrb[0].mxu0
    %v1786 = vpop.f32.mrb[0].mxu0
    %v1787 = vadd.f32 %v1603, %v1786
    %v1788 = vpop.f32.mrb[0].mxu0
    %1789 = vmatprep.mubr.bf16.mxu0 %v1597
    %1790 = vmatmul.mubr.bf16.gmra.mrb[0].mxu0 %v1596
    %v1791 = vpop.f32.mrb[0].mxu0
    %v1792 = vadd.f32 %v1603, %v1791
    %v1793 = vpop.f32.mrb[0].mxu0
    %v1794 = vpop.f32.mrb[0].mxu0
    %v1795 = vadd.f32 %v1603, %v1794
    %v1796 = vpop.f32.mrb[0].mxu0
    %1797 = vdwg.mxu0
    %1798 = vmatprep.subr.bf16.mxu0 0
    %1799 = vmatpush1.bf16.msra.mxu0 %v1717
    %1800 = vmatprep.subr.bf16.mxu0 0
    %1801 = vmatpush1.bf16.msra.mxu0 %v1718
    %1802 = vmatprep.subr.bf16.mxu0 0
    %1803 = vmatpush1.bf16.msra.mxu0 %v1719
    %1804 = vmatprep.subr.bf16.mxu0 0
    %1805 = vmatpush1.bf16.msra.mxu0 %v1720
    %1806 = vmatprep.subr.bf16.mxu0 0
    %1807 = vmatpush1.bf16.msra.mxu0 %v1721
    %1808 = vmatprep.subr.bf16.mxu0 0
    %1809 = vmatpush1.bf16.msra.mxu0 %v1722
    %1810 = vmatprep.subr.bf16.mxu0 0
    %1811 = vmatpush1.bf16.msra.mxu0 %v1723
    %1812 = vmatprep.subr.bf16.mxu0 0
    %1813 = vmatpush1.bf16.msra.mxu0 %v1724
    %1814 = vmatprep.subr.bf16.mxu0 0
    %1815 = vmatpush1.bf16.msra.mxu0 0
    %1816 = vmatprep.subr.bf16.mxu0 0
    %1817 = vmatpush1.bf16.msra.mxu0 0
    %1818 = vmatprep.subr.bf16.mxu0 0
    %1819 = vmatpush1.bf16.msra.mxu0 0
    %1820 = vmatprep.subr.bf16.mxu0 0
    %1821 = vmatpush1.bf16.msra.mxu0 0
    %1822 = vmatprep.subr.bf16.mxu0 0
    %1823 = vmatpush1.bf16.msra.mxu0 0
    %1824 = vmatprep.subr.bf16.mxu0 0
    %1825 = vmatpush1.bf16.msra.mxu0 0
    %1826 = vmatprep.subr.bf16.mxu0 0
    %1827 = vmatpush1.bf16.msra.mxu0 0
    %1828 = vmatprep.subr.bf16.mxu0 0
    %1829 = vmatpush1.bf16.msra.mxu0 0
    %1830 = vmatprep.mubr.bf16.mxu0 0
    %1831 = vmatmul.mubr.bf16.gmra.mrb[0].mxu0 %v1595
    %v1832 = vpop.f32.mrb[0].mxu0
    %v1833 = vadd.f32 %v1784, %v1832
    %v1834 = vpop.f32.mrb[0].mxu0
    %v1835 = vpop.f32.mrb[0].mxu0
    %v1836 = vadd.f32 %v1787, %v1835
    %v1837 = vpop.f32.mrb[0].mxu0
    %1838 = vmatprep.mubr.bf16.mxu0 0
    %1839 = vmatmul.mubr.bf16.gmra.mrb[0].mxu0 %v1598
    %v1840 = vpop.f32.mrb[0].mxu0
    %v1841 = vadd.f32 %v1792, %v1840
    %v1842 = vpop.f32.mrb[0].mxu0
    %v1843 = vpop.f32.mrb[0].mxu0
    %v1844 = vadd.f32 %v1795, %v1843
    %v1845 = vpop.f32.mrb[0].mxu0
    %1846 = vdwg.mxu0
    %v1847 = vadd.f32 %v1833, %v118
    %v1848 = vadd.f32 %v1836, %v119
    %v1849 = vadd.f32 %v1841, %v120
    %v1850 = vadd.f32 %v1844, %v121
    %1851 = vst [vmem:[%s7] sm:$0xff] %v1847
    %1852 = vst [vmem:[%s7 + $0x8] sm:$0xff] %v1848
    %1853 = vst [vmem:[%s7 + $0x10] sm:$0xff] %v1849
    %1854 = vst [vmem:[%s7 + $0x18] sm:$0xff] %v1850
    // Predicated region
    $region34: #{res_list_forward.1} parent=1 // pred_check
      _
    $region35: #{res_list_forward.1} parent=1 // pred_check_branch
      %1856 = sbr.rel (0) target = $region37
    $region36: #{res_list_forward.1} parent=1 // pred_region
      _
    $region37: #{res_list_forward.1} parent=1 // pred_fallthru
      _
    // Predicated region
    $region38: #{res_list_forward.1} parent=1 // pred_check
      _
    $region39: #{res_list_forward.1} parent=1 // pred_check_branch
      %1858 = sbr.rel (0) target = $region41
    $region40: #{res_list_forward.1} parent=1 // pred_region
      _
    $region41: #{res_list_forward.1} parent=1 // pred_fallthru
      _
    %1859 = vsyncpa [#allocation3], 1

</llo_original>
